<compile_context>
chip_gen: v7x
topology: tpu7x:2x2x1
jax: 0.10.0
libtpu: 0.0.40
codegen_flags: <defaults>
</compile_context>

<pallas_src>
import numpy as np
import jax
import jax.numpy as jnp
from jax.experimental import pallas as pl
from jax.experimental.pallas import tpu as pltpu


# ----------------------------- Parameters ---------------------------------------------------------

def init_params(key, n_signals, rnn_dim):
    """Deterministic init with PyTorch-default uniform(-1/sqrt(H), 1/sqrt(H)) ranges."""
    H = rnn_dim
    bound = 1.0 / np.sqrt(H)
    ks = jax.random.split(key, 10)
    u = lambda k, shape: jax.random.uniform(k, shape, jnp.float32, -bound, bound)
    return dict(
        enc_w_ih=u(ks[0], (3 * H, n_signals)),
        enc_w_hh=u(ks[1], (3 * H, H)),
        enc_b_ih=u(ks[2], (3 * H,)),
        enc_b_hh=u(ks[3], (3 * H,)),
        dec_w_ih=u(ks[4], (3 * H, H + 1)),
        dec_w_hh=u(ks[5], (3 * H, H)),
        dec_b_ih=u(ks[6], (3 * H,)),
        dec_b_hh=u(ks[7], (3 * H,)),
        out_w=u(ks[8], (1, H)),
        out_b=u(ks[9], (1,)),
    )


def _round_up(x, m):
    return ((x + m - 1) // m) * m


def prepare_params(params, wk_ahead):
    """One-time weight re-layout into 3 packed slabs (encoder weights, decoder weights, biases).

    Gate order everywhere is (r, z, n). The decoder's rank-1 y-feedback (w_out ⊗ w_ih_y) and the
    b_out contribution are folded into the recurrent weights / biases for steps >= 2.
    """
    f32 = jnp.float32
    H = int(params["enc_w_hh"].shape[1])
    D = int(params["enc_w_ih"].shape[1])
    K = int(wk_ahead)
    H2, H3, H4 = 2 * H, 3 * H, 4 * H
    LW = max(H4, 128)                       # lane width of all weight/bias slabs
    Din = max(8, _round_up(D + 1, 8))       # padded activation feature width (seqs | mask | 0s)

    ew = params["enc_w_ih"].astype(f32).T   # [D, 3H]
    eh = params["enc_w_hh"].astype(f32).T   # [H, 3H]
    dw = params["dec_w_ih"].astype(f32).T   # [H+1, 3H]  (rows: c part, then y part)
    dh = params["dec_w_hh"].astype(f32).T   # [H, 3H]
    e_bih = params["enc_b_ih"].astype(f32)
    e_bhh = params["enc_b_hh"].astype(f32)
    d_bih = params["dec_b_ih"].astype(f32)
    d_bhh = params["dec_b_hh"].astype(f32)
    wout = params["out_w"].astype(f32).T    # [H, 1]
    bout = params["out_b"].astype(f32)[0]   # scalar
    wy = dw[H:H + 1, :]                     # [1, 3H]   (y part of decoder input weights)

    # ---- encoder weight slab: rows [0:Din]=input proj (mask/pad rows zero), [Din:Din+H]=recurrent
    enc = jnp.zeros((Din + H, LW), f32)
    enc = enc.at[:D, :H3].set(ew)
    enc = enc.at[Din:Din + H, :H3].set(eh)

    # ---- decoder weight slab
    wfold = jnp.zeros((H, LW), f32)                                   # steps >= 2, one dot:
    wfold = wfold.at[:, :H2].set(dh[:, :H2] + wout @ wy[:, :H2])      #   cols 0:2H  folded rz
    wfold = wfold.at[:, H2:H3].set(dh[:, H2:H3])                      #   cols 2H:3H W_hh_n
    wfold = wfold.at[:, H3:H4].set(wout @ wy[:, H2:H3])               #   cols 3H:4H y-term of n
    wout_blk = jnp.zeros((K * H, LW), f32)                            # block-diagonal readout
    for k in range(K):
        wout_blk = wout_blk.at[k * H:(k + 1) * H, k].set(wout[:, 0])
    dec = jnp.zeros((3 * H + K * H, LW), f32)
    dec = dec.at[0:H, :H3].set(dw[:H, :])        # context part of input weights
    dec = dec.at[H:2 * H, :H3].set(dh)           # recurrent weights (step 1, unfolded)
    dec = dec.at[2 * H:3 * H, :].set(wfold)
    dec = dec.at[3 * H:, :].set(wout_blk)

    # ---- bias slab [8, LW] (one f32 vreg tile)
    bias = jnp.zeros((8, LW), f32)
    bias = bias.at[0, :H2].set(e_bih[:H2] + e_bhh[:H2])               # encoder gi bias (r,z)
    bias = bias.at[0, H2:H3].set(e_bih[H2:])                          # encoder gi bias (n, ih part)
    bias = bias.at[1, :H].set(e_bhh[H2:])                             # encoder b_hh (n)
    bias = bias.at[2, :H2].set(d_bih[:H2] + d_bhh[:H2])               # decoder gi bias, step 1
    bias = bias.at[2, H2:H3].set(d_bih[H2:])
    bias = bias.at[3, :H2].set(d_bih[:H2] + d_bhh[:H2] + bout * wy[0, :H2])   # step>=2 (b_out folded)
    bias = bias.at[3, H2:H3].set(d_bih[H2:] + bout * wy[0, H2:H3])
    bias = bias.at[4, :H].set(d_bhh[H2:])                             # decoder b_hh (n)
    bias = bias.at[5, :H3].set(wy[0])                                 # w_ih_y (for y0 = allys, step 1)
    bias = bias.at[6, 0].set(bout)                                    # output bias
    return dict(enc=enc, dec=dec, bias=bias)


# ----------------------------- Fused Pallas kernel + wrapper ---------------------------------------

def encoder_decoder_hidden_forward(prep, seqs, mask_seqs, allys, wk_ahead):
    """seqs [B,T,D] f32, mask_seqs [B,T] f32, allys [B,1] f32 -> predictions [B, wk_ahead]."""
    B, T, D = seqs.shape
    K = int(wk_ahead)
    enc, dec, bias = prep["enc"], prep["dec"], prep["bias"]
    H = dec.shape[0] // (3 + K)
    Din = enc.shape[0] - H
    LW = enc.shape[1]
    H2, H3, H4 = 2 * H, 3 * H, 4 * H

    # Activation slab: rows [0:T*B] time-major (seqs | mask | zero-pad), rows [T*B:(T+1)*B] = allys.
    x_tm = jnp.transpose(seqs, (1, 0, 2)).reshape(T * B, D).astype(jnp.float32)
    m_tm = jnp.transpose(mask_seqs, (1, 0)).reshape(T * B, 1).astype(jnp.float32)
    act_top = jnp.pad(jnp.concatenate([x_tm, m_tm], axis=1), ((0, 0), (0, Din - (D + 1))))
    act_bot = jnp.pad(allys.astype(jnp.float32), ((0, 0), (0, Din - 1)))
    act = jnp.concatenate([act_top, act_bot], axis=0)        # [(T+1)*B, Din]

    def kernel(act_ref, enc_ref, dec_ref, bias_ref, out_ref):
        f32 = jnp.float32

        # ---- unpack slabs (static, aligned sublane slices) ----
        bias_v = bias_ref[...]                    # [8, LW]
        e_bias_gi = bias_v[0:1, :]                # encoder gi bias (lanes >=3H are zero)
        e_b_hhn = bias_v[1:2, :H]
        d_bias_gi1 = bias_v[2:3, :]
        d_bias_gi2 = bias_v[3:4, :]
        d_b_hhn = bias_v[4:5, :H]
        d_wy = bias_v[5:6, :]
        bout = bias_v[6:7, 0:1]                   # [1, 1]

        x_all = act_ref[0:T * B, :]               # [T*B, Din]  (mask col has zero weight row)
        m_all = x_all[:, D:D + 1]                 # [T*B, 1]
        y0 = act_ref[T * B:(T + 1) * B, 0:1]      # [B, 1]

        e_wih = enc_ref[0:Din, :]                 # [Din, LW]
        e_whh = enc_ref[Din:Din + H, :]           # [H, LW]

        d_wc = dec_ref[0:H, :]                    # [H, LW]  context part of input weights
        d_whh1 = dec_ref[H:2 * H, :]              # [H, LW]  recurrent weights (step 1)
        d_wfold = dec_ref[2 * H:3 * H, :]         # [H, LW]  folded weights   (steps >= 2)
        d_wout_blk = dec_ref[3 * H:3 * H + K * H, :]   # [K*H, LW] block-diagonal readout

        def gate_update(pre_rz, gi_n, gh_n, h_prev):
            rz = jax.nn.sigmoid(pre_rz)           # (r,z) together in one [B,2H] block
            r = rz[:, :H]
            z = rz[:, H:]
            n = jnp.tanh(gi_n + r * gh_n)
            return (1.0 - z) * n + z * h_prev

        # ---------------- Encoder (masked GRU, fully unrolled, one dot per step) ----------------
        gi_all = jnp.dot(x_all, e_wih, preferred_element_type=f32) + e_bias_gi   # [T*B, LW]

        # t = 0: h_prev == 0, recurrent dot vanishes (b_hh for r,z already inside e_bias_gi)
        h = m_all[0:B] * gate_update(gi_all[0:B, :H2], gi_all[0:B, H2:H3], e_b_hhn,
                                     jnp.zeros((B, H), f32))
        for t in range(1, T):                     # static trip count -> fully unrolled
            lo = t * B
            gh_all = jnp.dot(h, e_whh, preferred_element_type=f32)               # [B, LW]
            pre_rz = gi_all[lo:lo + B, :H2] + gh_all[:, :H2]
            gh_n = gh_all[:, H2:H3] + e_b_hhn
            h_new = gate_update(pre_rz, gi_all[lo:lo + B, H2:H3], gh_n, h)
            m = m_all[lo:lo + B]
            h = m * h_new + (1.0 - m) * h         # masked steps keep previous hidden
        c = h                                     # context vector [B, H]

        # ---------------- Decoder step 1 (y_0 = allys, unfolded form) ----------------
        cgi = jnp.dot(c, d_wc, preferred_element_type=f32)        # [B, LW] (reused by all steps)
        gh1 = jnp.dot(c, d_whh1, preferred_element_type=f32)      # [B, LW]
        gi1 = cgi + d_bias_gi1 + y0 * d_wy
        hdec = gate_update(gi1[:, :H2] + gh1[:, :H2],
                           gi1[:, H2:H3],
                           gh1[:, H2:H3] + d_b_hhn,
                           c)
        hs = [hdec]

        # ---------------- Decoder steps 2..K: ONE [H,4H] dot per step (y-feedback folded) ------
        const2 = cgi + d_bias_gi2                                  # [B, LW] constant across steps
        for _ in range(1, K):                                      # static trip count
            all_h = jnp.dot(hdec, d_wfold, preferred_element_type=f32)           # [B, LW]
            hdec = gate_update(const2[:, :H2] + all_h[:, :H2],
                               const2[:, H2:H3] + all_h[:, H3:H4],
                               all_h[:, H2:H3] + d_b_hhn,
                               hdec)
            hs.append(hdec)

        # ---------------- Readout: one block-diagonal dot, single [B,K] store --------------------
        hs_cat = jnp.concatenate(hs, axis=1)                       # [B, K*H]
        res = jnp.dot(hs_cat, d_wout_blk, preferred_element_type=f32)            # [B, LW]
        out_ref[...] = res[:, :K] + bout

    vmem = pl.BlockSpec(memory_space=pltpu.MemorySpace.VMEM)
    return pl.pallas_call(
        kernel,
        out_shape=jax.ShapeDtypeStruct((B, K), jnp.float32),
        in_specs=[vmem, vmem, vmem, vmem],
        out_specs=vmem,
    )(act, enc, dec, bias)


# ----------------------------- Pure-JAX reference ---------------------------------------------------

def reference_forward(params, seqs, mask_seqs, allys, wk_ahead):
    H = params["enc_w_hh"].shape[1]

    def gru_cell(x, h, w_ih, w_hh, b_ih, b_hh):
        gi = x @ w_ih.T + b_ih
        gh = h @ w_hh.T + b_hh
        r = jax.nn.sigmoid(gi[:, :H] + gh[:, :H])
        z = jax.nn.sigmoid(gi[:, H:2 * H] + gh[:, H:2 * H])
        n = jnp.tanh(gi[:, 2 * H:] + r * gh[:, 2 * H:])
        return (1.0 - z) * n + z * h

    B, T, _ = seqs.shape
    h = jnp.zeros((B, H), jnp.float32)
    for t in range(T):
        h_new = gru_cell(seqs[:, t, :], h, params["enc_w_ih"], params["enc_w_hh"],
                         params["enc_b_ih"], params["enc_b_hh"])
        m = mask_seqs[:, t][:, None]
        h = m * h_new + (1.0 - m) * h
    c = h
    hdec = c
    y = allys
    preds = []
    for _ in range(wk_ahead):
        inp = jnp.concatenate([c, y], axis=-1)
        hdec = gru_cell(inp, hdec, params["dec_w_ih"], params["dec_w_hh"],
                        params["dec_b_ih"], params["dec_b_hh"])
        y = hdec @ params["out_w"].T + params["out_b"][None, :]
        preds.append(y)
    return jnp.concatenate(preds, axis=-1)


# ----------------------------- Main ------------------------------------------------------------------

if __name__ == "__main__":
    B, T, n_signals, rnn_dim, wk_ahead = 2, 8, 4, 32, 4

    key = jax.random.PRNGKey(0)
    kp, k1, k2, k3 = jax.random.split(key, 4)
    params = init_params(kp, n_signals, rnn_dim)
    prep = prepare_params(params, wk_ahead)             # one-time weight re-layout / slab packing

    seqs = jax.random.normal(k1, (B, T, n_signals), jnp.float32)
    mask_seqs = (jax.random.uniform(k2, (B, T)) > 0.2).astype(jnp.float32)
    allys = jax.random.normal(k3, (B, 1), jnp.float32)

    fwd = jax.jit(encoder_decoder_hidden_forward, static_argnums=(4,))
    out = fwd(prep, seqs, mask_seqs, allys, wk_ahead)
    out = jax.block_until_ready(out)

    ref = reference_forward(params, seqs, mask_seqs, allys, wk_ahead)
    np.testing.assert_allclose(np.asarray(out), np.asarray(ref), rtol=1e-4, atol=1e-4)

    print("KERNEL_OK")
</pallas_src>

<mosaic_0001>
module attributes {stable_mosaic.version = 11 : i64} {
  func.func @kernel(%arg0: memref<18x8xf32, #tpu.memory_space<vmem>>, %arg1: memref<40x128xf32, #tpu.memory_space<vmem>>, %arg2: memref<224x128xf32, #tpu.memory_space<vmem>>, %arg3: memref<8x128xf32, #tpu.memory_space<vmem>>, %arg4: memref<2x4xf32, #tpu.memory_space<vmem>>) attributes {dimension_semantics = [], scalar_prefetch = 0 : i64, scratch_operands = 0 : i64, tpu.core_type = #tpu.core_type<tc>} {
    %c0 = arith.constant 0 : index
    %c0_0 = arith.constant 0 : index
    %0 = vector.load %arg3[%c0, %c0_0] : memref<8x128xf32, #tpu.memory_space<vmem>>, vector<8x128xf32>
    %1 = vector.extract_strided_slice %0 {offsets = [0, 0], sizes = [1, 128], strides = [1, 1]} : vector<8x128xf32> to vector<1x128xf32>
    %2 = vector.extract_strided_slice %0 {offsets = [1, 0], sizes = [1, 32], strides = [1, 1]} : vector<8x128xf32> to vector<1x32xf32>
    %3 = vector.extract_strided_slice %0 {offsets = [2, 0], sizes = [1, 128], strides = [1, 1]} : vector<8x128xf32> to vector<1x128xf32>
    %4 = vector.extract_strided_slice %0 {offsets = [3, 0], sizes = [1, 128], strides = [1, 1]} : vector<8x128xf32> to vector<1x128xf32>
    %5 = vector.extract_strided_slice %0 {offsets = [4, 0], sizes = [1, 32], strides = [1, 1]} : vector<8x128xf32> to vector<1x32xf32>
    %6 = vector.extract_strided_slice %0 {offsets = [5, 0], sizes = [1, 128], strides = [1, 1]} : vector<8x128xf32> to vector<1x128xf32>
    %7 = vector.extract_strided_slice %0 {offsets = [6, 0], sizes = [1, 1], strides = [1, 1]} : vector<8x128xf32> to vector<1x1xf32>
    %c0_1 = arith.constant 0 : index
    %c0_2 = arith.constant 0 : index
    %8 = vector.load %arg0[%c0_1, %c0_2] : memref<18x8xf32, #tpu.memory_space<vmem>>, vector<16x8xf32>
    %9 = vector.extract_strided_slice %8 {offsets = [0, 4], sizes = [16, 1], strides = [1, 1]} : vector<16x8xf32> to vector<16x1xf32>
    %c16 = arith.constant 16 : index
    %c0_3 = arith.constant 0 : index
    %10 = vector.load %arg0[%c16, %c0_3] : memref<18x8xf32, #tpu.memory_space<vmem>>, vector<2x1xf32>
    %c0_4 = arith.constant 0 : index
    %c0_5 = arith.constant 0 : index
    %11 = vector.load %arg1[%c0_4, %c0_5] : memref<40x128xf32, #tpu.memory_space<vmem>>, vector<8x128xf32>
    %c8 = arith.constant 8 : index
    %c0_6 = arith.constant 0 : index
    %12 = vector.load %arg1[%c8, %c0_6] : memref<40x128xf32, #tpu.memory_space<vmem>>, vector<32x128xf32>
    %c0_7 = arith.constant 0 : index
    %c0_8 = arith.constant 0 : index
    %13 = vector.load %arg2[%c0_7, %c0_8] : memref<224x128xf32, #tpu.memory_space<vmem>>, vector<32x128xf32>
    %c32 = arith.constant 32 : index
    %c0_9 = arith.constant 0 : index
    %14 = vector.load %arg2[%c32, %c0_9] : memref<224x128xf32, #tpu.memory_space<vmem>>, vector<32x128xf32>
    %c64 = arith.constant 64 : index
    %c0_10 = arith.constant 0 : index
    %15 = vector.load %arg2[%c64, %c0_10] : memref<224x128xf32, #tpu.memory_space<vmem>>, vector<32x128xf32>
    %c96 = arith.constant 96 : index
    %c0_11 = arith.constant 0 : index
    %16 = vector.load %arg2[%c96, %c0_11] : memref<224x128xf32, #tpu.memory_space<vmem>>, vector<128x128xf32>
    %cst = arith.constant dense<0.000000e+00> : vector<16x128xf32>
    %17 = tpu.matmul %8, %11, %cst {dimension_numbers = #tpu.dot_dimension_numbers<[1], [0], [0], [1], [0, 0, 1, 1], [], []>} : vector<16x8xf32>, vector<8x128xf32>, vector<16x128xf32> -> vector<16x128xf32>
    %18 = vector.broadcast %1 : vector<1x128xf32> to vector<16x128xf32>
    %19 = arith.addf %17, %18 : vector<16x128xf32>
    %20 = vector.extract_strided_slice %9 {offsets = [0, 0], sizes = [2, 1], strides = [1, 1]} : vector<16x1xf32> to vector<2x1xf32>
    %21 = vector.extract_strided_slice %19 {offsets = [0, 0], sizes = [2, 64], strides = [1, 1]} : vector<16x128xf32> to vector<2x64xf32>
    %22 = vector.extract_strided_slice %19 {offsets = [0, 64], sizes = [2, 32], strides = [1, 1]} : vector<16x128xf32> to vector<2x32xf32>
    %cst_12 = arith.constant 0.000000e+00 : f32
    %23 = vector.broadcast %cst_12 : f32 to vector<2x32xf32>
    %24 = arith.negf %21 : vector<2x64xf32>
    %25 = math.exp %24 : vector<2x64xf32>
    %cst_13 = arith.constant 1.000000e+00 : f32
    %26 = vector.broadcast %cst_13 : f32 to vector<2x64xf32>
    %27 = arith.addf %26, %25 : vector<2x64xf32>
    %28 = arith.divf %26, %27 : vector<2x64xf32>
    %29 = vector.extract_strided_slice %28 {offsets = [0, 0], sizes = [2, 32], strides = [1, 1]} : vector<2x64xf32> to vector<2x32xf32>
    %30 = vector.extract_strided_slice %28 {offsets = [0, 32], sizes = [2, 32], strides = [1, 1]} : vector<2x64xf32> to vector<2x32xf32>
    %31 = vector.broadcast %2 : vector<1x32xf32> to vector<2x32xf32>
    %32 = arith.mulf %29, %31 : vector<2x32xf32>
    %33 = arith.addf %22, %32 : vector<2x32xf32>
    %34 = math.tanh %33 : vector<2x32xf32>
    %cst_14 = arith.constant 1.000000e+00 : f32
    %35 = vector.broadcast %cst_14 : f32 to vector<2x32xf32>
    %36 = arith.subf %35, %30 : vector<2x32xf32>
    %37 = arith.mulf %36, %34 : vector<2x32xf32>
    %38 = arith.mulf %30, %23 : vector<2x32xf32>
    %39 = arith.addf %37, %38 : vector<2x32xf32>
    %40 = vector.broadcast %20 : vector<2x1xf32> to vector<2x32xf32>
    %41 = arith.mulf %40, %39 : vector<2x32xf32>
    %cst_15 = arith.constant dense<0.000000e+00> : vector<2x128xf32>
    %42 = tpu.matmul %41, %12, %cst_15 {dimension_numbers = #tpu.dot_dimension_numbers<[1], [0], [0], [1], [0, 0, 1, 1], [], []>} : vector<2x32xf32>, vector<32x128xf32>, vector<2x128xf32> -> vector<2x128xf32>
    %43 = vector.extract_strided_slice %19 {offsets = [2, 0], sizes = [2, 64], strides = [1, 1]} : vector<16x128xf32> to vector<2x64xf32>
    %44 = vector.extract_strided_slice %42 {offsets = [0, 0], sizes = [2, 64], strides = [1, 1]} : vector<2x128xf32> to vector<2x64xf32>
    %45 = arith.addf %43, %44 : vector<2x64xf32>
    %46 = vector.extract_strided_slice %42 {offsets = [0, 64], sizes = [2, 32], strides = [1, 1]} : vector<2x128xf32> to vector<2x32xf32>
    %47 = vector.broadcast %2 : vector<1x32xf32> to vector<2x32xf32>
    %48 = arith.addf %46, %47 : vector<2x32xf32>
    %49 = vector.extract_strided_slice %19 {offsets = [2, 64], sizes = [2, 32], strides = [1, 1]} : vector<16x128xf32> to vector<2x32xf32>
    %50 = arith.negf %45 : vector<2x64xf32>
    %51 = math.exp %50 : vector<2x64xf32>
    %cst_16 = arith.constant 1.000000e+00 : f32
    %52 = vector.broadcast %cst_16 : f32 to vector<2x64xf32>
    %53 = arith.addf %52, %51 : vector<2x64xf32>
    %54 = arith.divf %52, %53 : vector<2x64xf32>
    %55 = vector.extract_strided_slice %54 {offsets = [0, 0], sizes = [2, 32], strides = [1, 1]} : vector<2x64xf32> to vector<2x32xf32>
    %56 = vector.extract_strided_slice %54 {offsets = [0, 32], sizes = [2, 32], strides = [1, 1]} : vector<2x64xf32> to vector<2x32xf32>
    %57 = arith.mulf %55, %48 : vector<2x32xf32>
    %58 = arith.addf %49, %57 : vector<2x32xf32>
    %59 = math.tanh %58 : vector<2x32xf32>
    %cst_17 = arith.constant 1.000000e+00 : f32
    %60 = vector.broadcast %cst_17 : f32 to vector<2x32xf32>
    %61 = arith.subf %60, %56 : vector<2x32xf32>
    %62 = arith.mulf %61, %59 : vector<2x32xf32>
    %63 = arith.mulf %56, %41 : vector<2x32xf32>
    %64 = arith.addf %62, %63 : vector<2x32xf32>
    %65 = vector.extract_strided_slice %9 {offsets = [2, 0], sizes = [2, 1], strides = [1, 1]} : vector<16x1xf32> to vector<2x1xf32>
    %66 = vector.broadcast %65 : vector<2x1xf32> to vector<2x32xf32>
    %67 = arith.mulf %66, %64 : vector<2x32xf32>
    %cst_18 = arith.constant 1.000000e+00 : f32
    %68 = vector.broadcast %cst_18 : f32 to vector<2x1xf32>
    %69 = arith.subf %68, %65 : vector<2x1xf32>
    %70 = vector.broadcast %69 : vector<2x1xf32> to vector<2x32xf32>
    %71 = arith.mulf %70, %41 : vector<2x32xf32>
    %72 = arith.addf %67, %71 : vector<2x32xf32>
    %cst_19 = arith.constant dense<0.000000e+00> : vector<2x128xf32>
    %73 = tpu.matmul %72, %12, %cst_19 {dimension_numbers = #tpu.dot_dimension_numbers<[1], [0], [0], [1], [0, 0, 1, 1], [], []>} : vector<2x32xf32>, vector<32x128xf32>, vector<2x128xf32> -> vector<2x128xf32>
    %74 = vector.extract_strided_slice %19 {offsets = [4, 0], sizes = [2, 64], strides = [1, 1]} : vector<16x128xf32> to vector<2x64xf32>
    %75 = vector.extract_strided_slice %73 {offsets = [0, 0], sizes = [2, 64], strides = [1, 1]} : vector<2x128xf32> to vector<2x64xf32>
    %76 = arith.addf %74, %75 : vector<2x64xf32>
    %77 = vector.extract_strided_slice %73 {offsets = [0, 64], sizes = [2, 32], strides = [1, 1]} : vector<2x128xf32> to vector<2x32xf32>
    %78 = vector.broadcast %2 : vector<1x32xf32> to vector<2x32xf32>
    %79 = arith.addf %77, %78 : vector<2x32xf32>
    %80 = vector.extract_strided_slice %19 {offsets = [4, 64], sizes = [2, 32], strides = [1, 1]} : vector<16x128xf32> to vector<2x32xf32>
    %81 = arith.negf %76 : vector<2x64xf32>
    %82 = math.exp %81 : vector<2x64xf32>
    %cst_20 = arith.constant 1.000000e+00 : f32
    %83 = vector.broadcast %cst_20 : f32 to vector<2x64xf32>
    %84 = arith.addf %83, %82 : vector<2x64xf32>
    %85 = arith.divf %83, %84 : vector<2x64xf32>
    %86 = vector.extract_strided_slice %85 {offsets = [0, 0], sizes = [2, 32], strides = [1, 1]} : vector<2x64xf32> to vector<2x32xf32>
    %87 = vector.extract_strided_slice %85 {offsets = [0, 32], sizes = [2, 32], strides = [1, 1]} : vector<2x64xf32> to vector<2x32xf32>
    %88 = arith.mulf %86, %79 : vector<2x32xf32>
    %89 = arith.addf %80, %88 : vector<2x32xf32>
    %90 = math.tanh %89 : vector<2x32xf32>
    %cst_21 = arith.constant 1.000000e+00 : f32
    %91 = vector.broadcast %cst_21 : f32 to vector<2x32xf32>
    %92 = arith.subf %91, %87 : vector<2x32xf32>
    %93 = arith.mulf %92, %90 : vector<2x32xf32>
    %94 = arith.mulf %87, %72 : vector<2x32xf32>
    %95 = arith.addf %93, %94 : vector<2x32xf32>
    %96 = vector.extract_strided_slice %9 {offsets = [4, 0], sizes = [2, 1], strides = [1, 1]} : vector<16x1xf32> to vector<2x1xf32>
    %97 = vector.broadcast %96 : vector<2x1xf32> to vector<2x32xf32>
    %98 = arith.mulf %97, %95 : vector<2x32xf32>
    %cst_22 = arith.constant 1.000000e+00 : f32
    %99 = vector.broadcast %cst_22 : f32 to vector<2x1xf32>
    %100 = arith.subf %99, %96 : vector<2x1xf32>
    %101 = vector.broadcast %100 : vector<2x1xf32> to vector<2x32xf32>
    %102 = arith.mulf %101, %72 : vector<2x32xf32>
    %103 = arith.addf %98, %102 : vector<2x32xf32>
    %cst_23 = arith.constant dense<0.000000e+00> : vector<2x128xf32>
    %104 = tpu.matmul %103, %12, %cst_23 {dimension_numbers = #tpu.dot_dimension_numbers<[1], [0], [0], [1], [0, 0, 1, 1], [], []>} : vector<2x32xf32>, vector<32x128xf32>, vector<2x128xf32> -> vector<2x128xf32>
    %105 = vector.extract_strided_slice %19 {offsets = [6, 0], sizes = [2, 64], strides = [1, 1]} : vector<16x128xf32> to vector<2x64xf32>
    %106 = vector.extract_strided_slice %104 {offsets = [0, 0], sizes = [2, 64], strides = [1, 1]} : vector<2x128xf32> to vector<2x64xf32>
    %107 = arith.addf %105, %106 : vector<2x64xf32>
    %108 = vector.extract_strided_slice %104 {offsets = [0, 64], sizes = [2, 32], strides = [1, 1]} : vector<2x128xf32> to vector<2x32xf32>
    %109 = vector.broadcast %2 : vector<1x32xf32> to vector<2x32xf32>
    %110 = arith.addf %108, %109 : vector<2x32xf32>
    %111 = vector.extract_strided_slice %19 {offsets = [6, 64], sizes = [2, 32], strides = [1, 1]} : vector<16x128xf32> to vector<2x32xf32>
    %112 = arith.negf %107 : vector<2x64xf32>
    %113 = math.exp %112 : vector<2x64xf32>
    %cst_24 = arith.constant 1.000000e+00 : f32
    %114 = vector.broadcast %cst_24 : f32 to vector<2x64xf32>
    %115 = arith.addf %114, %113 : vector<2x64xf32>
    %116 = arith.divf %114, %115 : vector<2x64xf32>
    %117 = vector.extract_strided_slice %116 {offsets = [0, 0], sizes = [2, 32], strides = [1, 1]} : vector<2x64xf32> to vector<2x32xf32>
    %118 = vector.extract_strided_slice %116 {offsets = [0, 32], sizes = [2, 32], strides = [1, 1]} : vector<2x64xf32> to vector<2x32xf32>
    %119 = arith.mulf %117, %110 : vector<2x32xf32>
    %120 = arith.addf %111, %119 : vector<2x32xf32>
    %121 = math.tanh %120 : vector<2x32xf32>
    %cst_25 = arith.constant 1.000000e+00 : f32
    %122 = vector.broadcast %cst_25 : f32 to vector<2x32xf32>
    %123 = arith.subf %122, %118 : vector<2x32xf32>
    %124 = arith.mulf %123, %121 : vector<2x32xf32>
    %125 = arith.mulf %118, %103 : vector<2x32xf32>
    %126 = arith.addf %124, %125 : vector<2x32xf32>
    %127 = vector.extract_strided_slice %9 {offsets = [6, 0], sizes = [2, 1], strides = [1, 1]} : vector<16x1xf32> to vector<2x1xf32>
    %128 = vector.broadcast %127 : vector<2x1xf32> to vector<2x32xf32>
    %129 = arith.mulf %128, %126 : vector<2x32xf32>
    %cst_26 = arith.constant 1.000000e+00 : f32
    %130 = vector.broadcast %cst_26 : f32 to vector<2x1xf32>
    %131 = arith.subf %130, %127 : vector<2x1xf32>
    %132 = vector.broadcast %131 : vector<2x1xf32> to vector<2x32xf32>
    %133 = arith.mulf %132, %103 : vector<2x32xf32>
    %134 = arith.addf %129, %133 : vector<2x32xf32>
    %cst_27 = arith.constant dense<0.000000e+00> : vector<2x128xf32>
    %135 = tpu.matmul %134, %12, %cst_27 {dimension_numbers = #tpu.dot_dimension_numbers<[1], [0], [0], [1], [0, 0, 1, 1], [], []>} : vector<2x32xf32>, vector<32x128xf32>, vector<2x128xf32> -> vector<2x128xf32>
    %136 = vector.extract_strided_slice %19 {offsets = [8, 0], sizes = [2, 64], strides = [1, 1]} : vector<16x128xf32> to vector<2x64xf32>
    %137 = vector.extract_strided_slice %135 {offsets = [0, 0], sizes = [2, 64], strides = [1, 1]} : vector<2x128xf32> to vector<2x64xf32>
    %138 = arith.addf %136, %137 : vector<2x64xf32>
    %139 = vector.extract_strided_slice %135 {offsets = [0, 64], sizes = [2, 32], strides = [1, 1]} : vector<2x128xf32> to vector<2x32xf32>
    %140 = vector.broadcast %2 : vector<1x32xf32> to vector<2x32xf32>
    %141 = arith.addf %139, %140 : vector<2x32xf32>
    %142 = vector.extract_strided_slice %19 {offsets = [8, 64], sizes = [2, 32], strides = [1, 1]} : vector<16x128xf32> to vector<2x32xf32>
    %143 = arith.negf %138 : vector<2x64xf32>
    %144 = math.exp %143 : vector<2x64xf32>
    %cst_28 = arith.constant 1.000000e+00 : f32
    %145 = vector.broadcast %cst_28 : f32 to vector<2x64xf32>
    %146 = arith.addf %145, %144 : vector<2x64xf32>
    %147 = arith.divf %145, %146 : vector<2x64xf32>
    %148 = vector.extract_strided_slice %147 {offsets = [0, 0], sizes = [2, 32], strides = [1, 1]} : vector<2x64xf32> to vector<2x32xf32>
    %149 = vector.extract_strided_slice %147 {offsets = [0, 32], sizes = [2, 32], strides = [1, 1]} : vector<2x64xf32> to vector<2x32xf32>
    %150 = arith.mulf %148, %141 : vector<2x32xf32>
    %151 = arith.addf %142, %150 : vector<2x32xf32>
    %152 = math.tanh %151 : vector<2x32xf32>
    %cst_29 = arith.constant 1.000000e+00 : f32
    %153 = vector.broadcast %cst_29 : f32 to vector<2x32xf32>
    %154 = arith.subf %153, %149 : vector<2x32xf32>
    %155 = arith.mulf %154, %152 : vector<2x32xf32>
    %156 = arith.mulf %149, %134 : vector<2x32xf32>
    %157 = arith.addf %155, %156 : vector<2x32xf32>
    %158 = vector.extract_strided_slice %9 {offsets = [8, 0], sizes = [2, 1], strides = [1, 1]} : vector<16x1xf32> to vector<2x1xf32>
    %159 = vector.broadcast %158 : vector<2x1xf32> to vector<2x32xf32>
    %160 = arith.mulf %159, %157 : vector<2x32xf32>
    %cst_30 = arith.constant 1.000000e+00 : f32
    %161 = vector.broadcast %cst_30 : f32 to vector<2x1xf32>
    %162 = arith.subf %161, %158 : vector<2x1xf32>
    %163 = vector.broadcast %162 : vector<2x1xf32> to vector<2x32xf32>
    %164 = arith.mulf %163, %134 : vector<2x32xf32>
    %165 = arith.addf %160, %164 : vector<2x32xf32>
    %cst_31 = arith.constant dense<0.000000e+00> : vector<2x128xf32>
    %166 = tpu.matmul %165, %12, %cst_31 {dimension_numbers = #tpu.dot_dimension_numbers<[1], [0], [0], [1], [0, 0, 1, 1], [], []>} : vector<2x32xf32>, vector<32x128xf32>, vector<2x128xf32> -> vector<2x128xf32>
    %167 = vector.extract_strided_slice %19 {offsets = [10, 0], sizes = [2, 64], strides = [1, 1]} : vector<16x128xf32> to vector<2x64xf32>
    %168 = vector.extract_strided_slice %166 {offsets = [0, 0], sizes = [2, 64], strides = [1, 1]} : vector<2x128xf32> to vector<2x64xf32>
    %169 = arith.addf %167, %168 : vector<2x64xf32>
    %170 = vector.extract_strided_slice %166 {offsets = [0, 64], sizes = [2, 32], strides = [1, 1]} : vector<2x128xf32> to vector<2x32xf32>
    %171 = vector.broadcast %2 : vector<1x32xf32> to vector<2x32xf32>
    %172 = arith.addf %170, %171 : vector<2x32xf32>
    %173 = vector.extract_strided_slice %19 {offsets = [10, 64], sizes = [2, 32], strides = [1, 1]} : vector<16x128xf32> to vector<2x32xf32>
    %174 = arith.negf %169 : vector<2x64xf32>
    %175 = math.exp %174 : vector<2x64xf32>
    %cst_32 = arith.constant 1.000000e+00 : f32
    %176 = vector.broadcast %cst_32 : f32 to vector<2x64xf32>
    %177 = arith.addf %176, %175 : vector<2x64xf32>
    %178 = arith.divf %176, %177 : vector<2x64xf32>
    %179 = vector.extract_strided_slice %178 {offsets = [0, 0], sizes = [2, 32], strides = [1, 1]} : vector<2x64xf32> to vector<2x32xf32>
    %180 = vector.extract_strided_slice %178 {offsets = [0, 32], sizes = [2, 32], strides = [1, 1]} : vector<2x64xf32> to vector<2x32xf32>
    %181 = arith.mulf %179, %172 : vector<2x32xf32>
    %182 = arith.addf %173, %181 : vector<2x32xf32>
    %183 = math.tanh %182 : vector<2x32xf32>
    %cst_33 = arith.constant 1.000000e+00 : f32
    %184 = vector.broadcast %cst_33 : f32 to vector<2x32xf32>
    %185 = arith.subf %184, %180 : vector<2x32xf32>
    %186 = arith.mulf %185, %183 : vector<2x32xf32>
    %187 = arith.mulf %180, %165 : vector<2x32xf32>
    %188 = arith.addf %186, %187 : vector<2x32xf32>
    %189 = vector.extract_strided_slice %9 {offsets = [10, 0], sizes = [2, 1], strides = [1, 1]} : vector<16x1xf32> to vector<2x1xf32>
    %190 = vector.broadcast %189 : vector<2x1xf32> to vector<2x32xf32>
    %191 = arith.mulf %190, %188 : vector<2x32xf32>
    %cst_34 = arith.constant 1.000000e+00 : f32
    %192 = vector.broadcast %cst_34 : f32 to vector<2x1xf32>
    %193 = arith.subf %192, %189 : vector<2x1xf32>
    %194 = vector.broadcast %193 : vector<2x1xf32> to vector<2x32xf32>
    %195 = arith.mulf %194, %165 : vector<2x32xf32>
    %196 = arith.addf %191, %195 : vector<2x32xf32>
    %cst_35 = arith.constant dense<0.000000e+00> : vector<2x128xf32>
    %197 = tpu.matmul %196, %12, %cst_35 {dimension_numbers = #tpu.dot_dimension_numbers<[1], [0], [0], [1], [0, 0, 1, 1], [], []>} : vector<2x32xf32>, vector<32x128xf32>, vector<2x128xf32> -> vector<2x128xf32>
    %198 = vector.extract_strided_slice %19 {offsets = [12, 0], sizes = [2, 64], strides = [1, 1]} : vector<16x128xf32> to vector<2x64xf32>
    %199 = vector.extract_strided_slice %197 {offsets = [0, 0], sizes = [2, 64], strides = [1, 1]} : vector<2x128xf32> to vector<2x64xf32>
    %200 = arith.addf %198, %199 : vector<2x64xf32>
    %201 = vector.extract_strided_slice %197 {offsets = [0, 64], sizes = [2, 32], strides = [1, 1]} : vector<2x128xf32> to vector<2x32xf32>
    %202 = vector.broadcast %2 : vector<1x32xf32> to vector<2x32xf32>
    %203 = arith.addf %201, %202 : vector<2x32xf32>
    %204 = vector.extract_strided_slice %19 {offsets = [12, 64], sizes = [2, 32], strides = [1, 1]} : vector<16x128xf32> to vector<2x32xf32>
    %205 = arith.negf %200 : vector<2x64xf32>
    %206 = math.exp %205 : vector<2x64xf32>
    %cst_36 = arith.constant 1.000000e+00 : f32
    %207 = vector.broadcast %cst_36 : f32 to vector<2x64xf32>
    %208 = arith.addf %207, %206 : vector<2x64xf32>
    %209 = arith.divf %207, %208 : vector<2x64xf32>
    %210 = vector.extract_strided_slice %209 {offsets = [0, 0], sizes = [2, 32], strides = [1, 1]} : vector<2x64xf32> to vector<2x32xf32>
    %211 = vector.extract_strided_slice %209 {offsets = [0, 32], sizes = [2, 32], strides = [1, 1]} : vector<2x64xf32> to vector<2x32xf32>
    %212 = arith.mulf %210, %203 : vector<2x32xf32>
    %213 = arith.addf %204, %212 : vector<2x32xf32>
    %214 = math.tanh %213 : vector<2x32xf32>
    %cst_37 = arith.constant 1.000000e+00 : f32
    %215 = vector.broadcast %cst_37 : f32 to vector<2x32xf32>
    %216 = arith.subf %215, %211 : vector<2x32xf32>
    %217 = arith.mulf %216, %214 : vector<2x32xf32>
    %218 = arith.mulf %211, %196 : vector<2x32xf32>
    %219 = arith.addf %217, %218 : vector<2x32xf32>
    %220 = vector.extract_strided_slice %9 {offsets = [12, 0], sizes = [2, 1], strides = [1, 1]} : vector<16x1xf32> to vector<2x1xf32>
    %221 = vector.broadcast %220 : vector<2x1xf32> to vector<2x32xf32>
    %222 = arith.mulf %221, %219 : vector<2x32xf32>
    %cst_38 = arith.constant 1.000000e+00 : f32
    %223 = vector.broadcast %cst_38 : f32 to vector<2x1xf32>
    %224 = arith.subf %223, %220 : vector<2x1xf32>
    %225 = vector.broadcast %224 : vector<2x1xf32> to vector<2x32xf32>
    %226 = arith.mulf %225, %196 : vector<2x32xf32>
    %227 = arith.addf %222, %226 : vector<2x32xf32>
    %cst_39 = arith.constant dense<0.000000e+00> : vector<2x128xf32>
    %228 = tpu.matmul %227, %12, %cst_39 {dimension_numbers = #tpu.dot_dimension_numbers<[1], [0], [0], [1], [0, 0, 1, 1], [], []>} : vector<2x32xf32>, vector<32x128xf32>, vector<2x128xf32> -> vector<2x128xf32>
    %229 = vector.extract_strided_slice %19 {offsets = [14, 0], sizes = [2, 64], strides = [1, 1]} : vector<16x128xf32> to vector<2x64xf32>
    %230 = vector.extract_strided_slice %228 {offsets = [0, 0], sizes = [2, 64], strides = [1, 1]} : vector<2x128xf32> to vector<2x64xf32>
    %231 = arith.addf %229, %230 : vector<2x64xf32>
    %232 = vector.extract_strided_slice %228 {offsets = [0, 64], sizes = [2, 32], strides = [1, 1]} : vector<2x128xf32> to vector<2x32xf32>
    %233 = vector.broadcast %2 : vector<1x32xf32> to vector<2x32xf32>
    %234 = arith.addf %232, %233 : vector<2x32xf32>
    %235 = vector.extract_strided_slice %19 {offsets = [14, 64], sizes = [2, 32], strides = [1, 1]} : vector<16x128xf32> to vector<2x32xf32>
    %236 = arith.negf %231 : vector<2x64xf32>
    %237 = math.exp %236 : vector<2x64xf32>
    %cst_40 = arith.constant 1.000000e+00 : f32
    %238 = vector.broadcast %cst_40 : f32 to vector<2x64xf32>
    %239 = arith.addf %238, %237 : vector<2x64xf32>
    %240 = arith.divf %238, %239 : vector<2x64xf32>
    %241 = vector.extract_strided_slice %240 {offsets = [0, 0], sizes = [2, 32], strides = [1, 1]} : vector<2x64xf32> to vector<2x32xf32>
    %242 = vector.extract_strided_slice %240 {offsets = [0, 32], sizes = [2, 32], strides = [1, 1]} : vector<2x64xf32> to vector<2x32xf32>
    %243 = arith.mulf %241, %234 : vector<2x32xf32>
    %244 = arith.addf %235, %243 : vector<2x32xf32>
    %245 = math.tanh %244 : vector<2x32xf32>
    %cst_41 = arith.constant 1.000000e+00 : f32
    %246 = vector.broadcast %cst_41 : f32 to vector<2x32xf32>
    %247 = arith.subf %246, %242 : vector<2x32xf32>
    %248 = arith.mulf %247, %245 : vector<2x32xf32>
    %249 = arith.mulf %242, %227 : vector<2x32xf32>
    %250 = arith.addf %248, %249 : vector<2x32xf32>
    %251 = vector.extract_strided_slice %9 {offsets = [14, 0], sizes = [2, 1], strides = [1, 1]} : vector<16x1xf32> to vector<2x1xf32>
    %252 = vector.broadcast %251 : vector<2x1xf32> to vector<2x32xf32>
    %253 = arith.mulf %252, %250 : vector<2x32xf32>
    %cst_42 = arith.constant 1.000000e+00 : f32
    %254 = vector.broadcast %cst_42 : f32 to vector<2x1xf32>
    %255 = arith.subf %254, %251 : vector<2x1xf32>
    %256 = vector.broadcast %255 : vector<2x1xf32> to vector<2x32xf32>
    %257 = arith.mulf %256, %227 : vector<2x32xf32>
    %258 = arith.addf %253, %257 : vector<2x32xf32>
    %cst_43 = arith.constant dense<0.000000e+00> : vector<2x128xf32>
    %259 = tpu.matmul %258, %13, %cst_43 {dimension_numbers = #tpu.dot_dimension_numbers<[1], [0], [0], [1], [0, 0, 1, 1], [], []>} : vector<2x32xf32>, vector<32x128xf32>, vector<2x128xf32> -> vector<2x128xf32>
    %cst_44 = arith.constant dense<0.000000e+00> : vector<2x128xf32>
    %260 = tpu.matmul %258, %14, %cst_44 {dimension_numbers = #tpu.dot_dimension_numbers<[1], [0], [0], [1], [0, 0, 1, 1], [], []>} : vector<2x32xf32>, vector<32x128xf32>, vector<2x128xf32> -> vector<2x128xf32>
    %261 = vector.broadcast %3 : vector<1x128xf32> to vector<2x128xf32>
    %262 = arith.addf %259, %261 : vector<2x128xf32>
    %263 = vector.broadcast %10 : vector<2x1xf32> to vector<2x128xf32>
    %264 = vector.broadcast %6 : vector<1x128xf32> to vector<2x128xf32>
    %265 = arith.mulf %263, %264 : vector<2x128xf32>
    %266 = arith.addf %262, %265 : vector<2x128xf32>
    %267 = vector.extract_strided_slice %266 {offsets = [0, 0], sizes = [2, 64], strides = [1, 1]} : vector<2x128xf32> to vector<2x64xf32>
    %268 = vector.extract_strided_slice %260 {offsets = [0, 0], sizes = [2, 64], strides = [1, 1]} : vector<2x128xf32> to vector<2x64xf32>
    %269 = arith.addf %267, %268 : vector<2x64xf32>
    %270 = vector.extract_strided_slice %266 {offsets = [0, 64], sizes = [2, 32], strides = [1, 1]} : vector<2x128xf32> to vector<2x32xf32>
    %271 = vector.extract_strided_slice %260 {offsets = [0, 64], sizes = [2, 32], strides = [1, 1]} : vector<2x128xf32> to vector<2x32xf32>
    %272 = vector.broadcast %5 : vector<1x32xf32> to vector<2x32xf32>
    %273 = arith.addf %271, %272 : vector<2x32xf32>
    %274 = arith.negf %269 : vector<2x64xf32>
    %275 = math.exp %274 : vector<2x64xf32>
    %cst_45 = arith.constant 1.000000e+00 : f32
    %276 = vector.broadcast %cst_45 : f32 to vector<2x64xf32>
    %277 = arith.addf %276, %275 : vector<2x64xf32>
    %278 = arith.divf %276, %277 : vector<2x64xf32>
    %279 = vector.extract_strided_slice %278 {offsets = [0, 0], sizes = [2, 32], strides = [1, 1]} : vector<2x64xf32> to vector<2x32xf32>
    %280 = vector.extract_strided_slice %278 {offsets = [0, 32], sizes = [2, 32], strides = [1, 1]} : vector<2x64xf32> to vector<2x32xf32>
    %281 = arith.mulf %279, %273 : vector<2x32xf32>
    %282 = arith.addf %270, %281 : vector<2x32xf32>
    %283 = math.tanh %282 : vector<2x32xf32>
    %cst_46 = arith.constant 1.000000e+00 : f32
    %284 = vector.broadcast %cst_46 : f32 to vector<2x32xf32>
    %285 = arith.subf %284, %280 : vector<2x32xf32>
    %286 = arith.mulf %285, %283 : vector<2x32xf32>
    %287 = arith.mulf %280, %258 : vector<2x32xf32>
    %288 = arith.addf %286, %287 : vector<2x32xf32>
    %289 = vector.broadcast %4 : vector<1x128xf32> to vector<2x128xf32>
    %290 = arith.addf %259, %289 : vector<2x128xf32>
    %cst_47 = arith.constant dense<0.000000e+00> : vector<2x128xf32>
    %291 = tpu.matmul %288, %15, %cst_47 {dimension_numbers = #tpu.dot_dimension_numbers<[1], [0], [0], [1], [0, 0, 1, 1], [], []>} : vector<2x32xf32>, vector<32x128xf32>, vector<2x128xf32> -> vector<2x128xf32>
    %292 = vector.extract_strided_slice %290 {offsets = [0, 0], sizes = [2, 64], strides = [1, 1]} : vector<2x128xf32> to vector<2x64xf32>
    %293 = vector.extract_strided_slice %291 {offsets = [0, 0], sizes = [2, 64], strides = [1, 1]} : vector<2x128xf32> to vector<2x64xf32>
    %294 = arith.addf %292, %293 : vector<2x64xf32>
    %295 = vector.extract_strided_slice %290 {offsets = [0, 64], sizes = [2, 32], strides = [1, 1]} : vector<2x128xf32> to vector<2x32xf32>
    %296 = vector.extract_strided_slice %291 {offsets = [0, 96], sizes = [2, 32], strides = [1, 1]} : vector<2x128xf32> to vector<2x32xf32>
    %297 = arith.addf %295, %296 : vector<2x32xf32>
    %298 = vector.extract_strided_slice %291 {offsets = [0, 64], sizes = [2, 32], strides = [1, 1]} : vector<2x128xf32> to vector<2x32xf32>
    %299 = vector.broadcast %5 : vector<1x32xf32> to vector<2x32xf32>
    %300 = arith.addf %298, %299 : vector<2x32xf32>
    %301 = arith.negf %294 : vector<2x64xf32>
    %302 = math.exp %301 : vector<2x64xf32>
    %cst_48 = arith.constant 1.000000e+00 : f32
    %303 = vector.broadcast %cst_48 : f32 to vector<2x64xf32>
    %304 = arith.addf %303, %302 : vector<2x64xf32>
    %305 = arith.divf %303, %304 : vector<2x64xf32>
    %306 = vector.extract_strided_slice %305 {offsets = [0, 0], sizes = [2, 32], strides = [1, 1]} : vector<2x64xf32> to vector<2x32xf32>
    %307 = vector.extract_strided_slice %305 {offsets = [0, 32], sizes = [2, 32], strides = [1, 1]} : vector<2x64xf32> to vector<2x32xf32>
    %308 = arith.mulf %306, %300 : vector<2x32xf32>
    %309 = arith.addf %297, %308 : vector<2x32xf32>
    %310 = math.tanh %309 : vector<2x32xf32>
    %cst_49 = arith.constant 1.000000e+00 : f32
    %311 = vector.broadcast %cst_49 : f32 to vector<2x32xf32>
    %312 = arith.subf %311, %307 : vector<2x32xf32>
    %313 = arith.mulf %312, %310 : vector<2x32xf32>
    %314 = arith.mulf %307, %288 : vector<2x32xf32>
    %315 = arith.addf %313, %314 : vector<2x32xf32>
    %cst_50 = arith.constant dense<0.000000e+00> : vector<2x128xf32>
    %316 = tpu.matmul %315, %15, %cst_50 {dimension_numbers = #tpu.dot_dimension_numbers<[1], [0], [0], [1], [0, 0, 1, 1], [], []>} : vector<2x32xf32>, vector<32x128xf32>, vector<2x128xf32> -> vector<2x128xf32>
    %317 = vector.extract_strided_slice %290 {offsets = [0, 0], sizes = [2, 64], strides = [1, 1]} : vector<2x128xf32> to vector<2x64xf32>
    %318 = vector.extract_strided_slice %316 {offsets = [0, 0], sizes = [2, 64], strides = [1, 1]} : vector<2x128xf32> to vector<2x64xf32>
    %319 = arith.addf %317, %318 : vector<2x64xf32>
    %320 = vector.extract_strided_slice %290 {offsets = [0, 64], sizes = [2, 32], strides = [1, 1]} : vector<2x128xf32> to vector<2x32xf32>
    %321 = vector.extract_strided_slice %316 {offsets = [0, 96], sizes = [2, 32], strides = [1, 1]} : vector<2x128xf32> to vector<2x32xf32>
    %322 = arith.addf %320, %321 : vector<2x32xf32>
    %323 = vector.extract_strided_slice %316 {offsets = [0, 64], sizes = [2, 32], strides = [1, 1]} : vector<2x128xf32> to vector<2x32xf32>
    %324 = vector.broadcast %5 : vector<1x32xf32> to vector<2x32xf32>
    %325 = arith.addf %323, %324 : vector<2x32xf32>
    %326 = arith.negf %319 : vector<2x64xf32>
    %327 = math.exp %326 : vector<2x64xf32>
    %cst_51 = arith.constant 1.000000e+00 : f32
    %328 = vector.broadcast %cst_51 : f32 to vector<2x64xf32>
    %329 = arith.addf %328, %327 : vector<2x64xf32>
    %330 = arith.divf %328, %329 : vector<2x64xf32>
    %331 = vector.extract_strided_slice %330 {offsets = [0, 0], sizes = [2, 32], strides = [1, 1]} : vector<2x64xf32> to vector<2x32xf32>
    %332 = vector.extract_strided_slice %330 {offsets = [0, 32], sizes = [2, 32], strides = [1, 1]} : vector<2x64xf32> to vector<2x32xf32>
    %333 = arith.mulf %331, %325 : vector<2x32xf32>
    %334 = arith.addf %322, %333 : vector<2x32xf32>
    %335 = math.tanh %334 : vector<2x32xf32>
    %cst_52 = arith.constant 1.000000e+00 : f32
    %336 = vector.broadcast %cst_52 : f32 to vector<2x32xf32>
    %337 = arith.subf %336, %332 : vector<2x32xf32>
    %338 = arith.mulf %337, %335 : vector<2x32xf32>
    %339 = arith.mulf %332, %315 : vector<2x32xf32>
    %340 = arith.addf %338, %339 : vector<2x32xf32>
    %cst_53 = arith.constant dense<0.000000e+00> : vector<2x128xf32>
    %341 = tpu.matmul %340, %15, %cst_53 {dimension_numbers = #tpu.dot_dimension_numbers<[1], [0], [0], [1], [0, 0, 1, 1], [], []>} : vector<2x32xf32>, vector<32x128xf32>, vector<2x128xf32> -> vector<2x128xf32>
    %342 = vector.extract_strided_slice %290 {offsets = [0, 0], sizes = [2, 64], strides = [1, 1]} : vector<2x128xf32> to vector<2x64xf32>
    %343 = vector.extract_strided_slice %341 {offsets = [0, 0], sizes = [2, 64], strides = [1, 1]} : vector<2x128xf32> to vector<2x64xf32>
    %344 = arith.addf %342, %343 : vector<2x64xf32>
    %345 = vector.extract_strided_slice %290 {offsets = [0, 64], sizes = [2, 32], strides = [1, 1]} : vector<2x128xf32> to vector<2x32xf32>
    %346 = vector.extract_strided_slice %341 {offsets = [0, 96], sizes = [2, 32], strides = [1, 1]} : vector<2x128xf32> to vector<2x32xf32>
    %347 = arith.addf %345, %346 : vector<2x32xf32>
    %348 = vector.extract_strided_slice %341 {offsets = [0, 64], sizes = [2, 32], strides = [1, 1]} : vector<2x128xf32> to vector<2x32xf32>
    %349 = vector.broadcast %5 : vector<1x32xf32> to vector<2x32xf32>
    %350 = arith.addf %348, %349 : vector<2x32xf32>
    %351 = arith.negf %344 : vector<2x64xf32>
    %352 = math.exp %351 : vector<2x64xf32>
    %cst_54 = arith.constant 1.000000e+00 : f32
    %353 = vector.broadcast %cst_54 : f32 to vector<2x64xf32>
    %354 = arith.addf %353, %352 : vector<2x64xf32>
    %355 = arith.divf %353, %354 : vector<2x64xf32>
    %356 = vector.extract_strided_slice %355 {offsets = [0, 0], sizes = [2, 32], strides = [1, 1]} : vector<2x64xf32> to vector<2x32xf32>
    %357 = vector.extract_strided_slice %355 {offsets = [0, 32], sizes = [2, 32], strides = [1, 1]} : vector<2x64xf32> to vector<2x32xf32>
    %358 = arith.mulf %356, %350 : vector<2x32xf32>
    %359 = arith.addf %347, %358 : vector<2x32xf32>
    %360 = math.tanh %359 : vector<2x32xf32>
    %cst_55 = arith.constant 1.000000e+00 : f32
    %361 = vector.broadcast %cst_55 : f32 to vector<2x32xf32>
    %362 = arith.subf %361, %357 : vector<2x32xf32>
    %363 = arith.mulf %362, %360 : vector<2x32xf32>
    %364 = arith.mulf %357, %340 : vector<2x32xf32>
    %365 = arith.addf %363, %364 : vector<2x32xf32>
    %366 = tpu.concatenate %288, %315, %340, %365 in 1 : vector<2x32xf32>, vector<2x32xf32>, vector<2x32xf32>, vector<2x32xf32> -> vector<2x128xf32>
    %cst_56 = arith.constant dense<0.000000e+00> : vector<2x128xf32>
    %367 = tpu.matmul %366, %16, %cst_56 {dimension_numbers = #tpu.dot_dimension_numbers<[1], [0], [0], [1], [0, 0, 1, 1], [], []>} : vector<2x128xf32>, vector<128x128xf32>, vector<2x128xf32> -> vector<2x128xf32>
    %368 = vector.extract_strided_slice %367 {offsets = [0, 0], sizes = [2, 4], strides = [1, 1]} : vector<2x128xf32> to vector<2x4xf32>
    %369 = vector.broadcast %7 : vector<1x1xf32> to vector<2x4xf32>
    %370 = arith.addf %368, %369 : vector<2x4xf32>
    %c0_57 = arith.constant 0 : index
    %c0_58 = arith.constant 0 : index
    %371 = vector.load %arg4[%c0_57, %c0_58] : memref<2x4xf32, #tpu.memory_space<vmem>>, vector<2x4xf32>
    tpu.vector_store %arg4[%c0_57, %c0_58], %370 {strides = array<i32>} : memref<2x4xf32, #tpu.memory_space<vmem>>, vector<2x4xf32>,
    return
  }
}

</mosaic_0001>

<llo_original>
// kernel: encoder_decoder_hidden_forward.1
$region0: #{encoder_decoder_hidden_forward.1}
  #allocation0 [shape = 'u32[]', space=smem, size = 0x4, offset = 0x4, fixed_abs, tag = 'smem constant byte address 0x4 - core index']
  #allocation1 [shape = 'u32[144,128]{1,0:T(1,128)}', space=vmem, size = 0x12000, scoped, tag = 'internal scratch']
  %s0 = inlined_call_operand.vmem [shape: f32[18,8], index: 0, kind: input, shape index: {}]
  %s1 = inlined_call_operand.vmem [shape: f32[40,128], index: 1, kind: input, shape index: {}]
  %s2 = inlined_call_operand.hbm [shape: f32[224,128], index: 2, kind: input, shape index: {}]
  %s3 = inlined_call_operand.vmem [shape: f32[8,128], index: 3, kind: input, shape index: {}]
  %s4 = inlined_call_operand.hbm [shape: f32[2,4], index: 4, kind: output, shape index: {}]
  %s5 = sld [smem:[#allocation0]]
  $region30: #{encoder_decoder_hidden_forward.1} parent=0
    _
  %s7 = ssub.s32 1, %s5
  %s8 = scalar_select 0, %s7, %s5
  $region1: #{encoder_decoder_hidden_forward.1} parent=0
    #allocation2 [shape = 'u8[114688]{0}', space=vmem, size = 0x1c000, scoped, tag = 'input window, operand 2, single buffered']
    #allocation3 [shape = 's32[1]{0}', space=sflag, size = 0x4, scoped, tag = 'scoped memory for encoder_decoder_hidden_forward.1']
    #allocation4 [shape = 's32[1]{0}', space=sflag, size = 0x4, scoped, tag = 'scoped memory for encoder_decoder_hidden_forward.1']
    #allocation5 [shape = 'u8[1024]{0}', space=vmem, size = 0x400, scoped, tag = 'output window, operand 0, single buffered']
    %9 = vsyncpa [#allocation3], 0
    %10 = vsyncpa [#allocation4], 0
    // Predicated region
    $region2: #{encoder_decoder_hidden_forward.1} parent=1 // pred_check
      _
    $region3: #{encoder_decoder_hidden_forward.1} parent=1 // pred_check_branch
      %12 = sbr.rel (0) target = $region5
    $region4: #{encoder_decoder_hidden_forward.1} parent=1 // pred_region
      _
    $region5: #{encoder_decoder_hidden_forward.1} parent=1 // pred_fallthru
      _
    // Predicated region
    $region6: #{encoder_decoder_hidden_forward.1} parent=1 // pred_check
      _
    $region7: #{encoder_decoder_hidden_forward.1} parent=1 // pred_check_branch
      %14 = sbr.rel (0) target = $region9
    $region8: #{encoder_decoder_hidden_forward.1} parent=1 // pred_region
      _
    $region9: #{encoder_decoder_hidden_forward.1} parent=1 // pred_fallthru
      _
    // Predicated region
    $region10: #{encoder_decoder_hidden_forward.1} parent=1 // pred_check
      _
    $region11: #{encoder_decoder_hidden_forward.1} parent=1 // pred_check_branch
      %16 = sbr.rel (0) target = $region13
    $region12: #{encoder_decoder_hidden_forward.1} parent=1 // pred_region
      %s18 = ssub.s32 3584, 3584
      %19 = vsyncadd [#allocation3], %s18
      %s20 = sshll.u32 [#allocation2], 4
      %s21 = int_to_ptr.vmem [resolvable:$true] %s20
      %26 = dma.hbm_to_vmem [thread:$0]  %s2, 3584, %s21, [#allocation3], 128, 128, 8
    $region13: #{encoder_decoder_hidden_forward.1} parent=1 // pred_fallthru
      _
    // Predicated region
    $region14: #{encoder_decoder_hidden_forward.1} parent=1 // pred_check
      _
    $region15: #{encoder_decoder_hidden_forward.1} parent=1 // pred_check_branch
      %28 = sbr.rel (0) target = $region17
    $region16: #{encoder_decoder_hidden_forward.1} parent=1 // pred_region
      _
    $region17: #{encoder_decoder_hidden_forward.1} parent=1 // pred_fallthru
      _
    // Predicated region
    $region18: #{encoder_decoder_hidden_forward.1} parent=1 // pred_check
      _
    $region19: #{encoder_decoder_hidden_forward.1} parent=1 // pred_check_branch
      %30 = sbr.rel (0) target = $region21
    $region20: #{encoder_decoder_hidden_forward.1} parent=1 // pred_region
      %31 = dma.done [#allocation3], 3584
    $region21: #{encoder_decoder_hidden_forward.1} parent=1 // pred_fallthru
      _
    %v32 = vld [vmem:[%s3] sm:$0xff]
    %v33 = vld [vmem:[%s0] sm:$0xff]
    %v34 = vld [vmem:[%s0 + $0x8] sm:$0xff]
    %v35 = vld [vmem:[%s0 + $0x10] sm:$0x3]
    %v36 = vld [vmem:[%s1] sm:$0xff]
    %v37 = vld [vmem:[%s1 + $0x8] sm:$0xff]
    %v38 = vld [vmem:[%s1 + $0x10] sm:$0xff]
    %v39 = vld [vmem:[%s1 + $0x18] sm:$0xff]
    %v40 = vld [vmem:[%s1 + $0x20] sm:$0xff]
    %v41 = vld [vmem:[#allocation2] sm:$0xff]
    %v42 = vld [vmem:[#allocation2 + $0x8] sm:$0xff]
    %v43 = vld [vmem:[#allocation2 + $0x10] sm:$0xff]
    %v44 = vld [vmem:[#allocation2 + $0x18] sm:$0xff]
    %v45 = vld [vmem:[#allocation2 + $0x20] sm:$0xff]
    %v46 = vld [vmem:[#allocation2 + $0x28] sm:$0xff]
    %v47 = vld [vmem:[#allocation2 + $0x30] sm:$0xff]
    %v48 = vld [vmem:[#allocation2 + $0x38] sm:$0xff]
    %v49 = vld [vmem:[#allocation2 + $0x40] sm:$0xff]
    %v50 = vld [vmem:[#allocation2 + $0x48] sm:$0xff]
    %v51 = vld [vmem:[#allocation2 + $0x50] sm:$0xff]
    %v52 = vld [vmem:[#allocation2 + $0x58] sm:$0xff]
    %v53 = vld [vmem:[#allocation2 + $0x60] sm:$0xff]
    %v54 = vld [vmem:[#allocation2 + $0x68] sm:$0xff]
    %v55 = vld [vmem:[#allocation2 + $0x70] sm:$0xff]
    %v56 = vld [vmem:[#allocation2 + $0x78] sm:$0xff]
    %v57 = vld [vmem:[#allocation2 + $0x80] sm:$0xff]
    %v58 = vld [vmem:[#allocation2 + $0x88] sm:$0xff]
    %v59 = vld [vmem:[#allocation2 + $0x90] sm:$0xff]
    %v60 = vld [vmem:[#allocation2 + $0x98] sm:$0xff]
    %v61 = vld [vmem:[#allocation2 + $0xa0] sm:$0xff]
    %v62 = vld [vmem:[#allocation2 + $0xa8] sm:$0xff]
    %v63 = vld [vmem:[#allocation2 + $0xb0] sm:$0xff]
    %v64 = vld [vmem:[#allocation2 + $0xb8] sm:$0xff]
    %v65 = vld [vmem:[#allocation2 + $0xc0] sm:$0xff]
    %v66 = vld [vmem:[#allocation2 + $0xc8] sm:$0xff]
    %v67 = vld [vmem:[#allocation2 + $0xd0] sm:$0xff]
    %v68 = vld [vmem:[#allocation2 + $0xd8] sm:$0xff]
    %v69 = vlaneseq
    %v70 = vshrl.u32 %v69, 7
    %v71 = vsub.s32 0, %v70
    %v72 = vrot.slane %v32, %v71
    %vm73 = vcmask 64512
    %v75 = vsel %vm73, %v33, 0
    %v78 = vsel %vm73, %v34, 0
    %80 = vmatprep.subr.mxu0 0.0
    %81 = vmatpush1.msra.mxu0 %v36
    %82 = vmatprep.subr.mxu0 0.0
    %83 = vmatpush1.msra.mxu0 0.0
    %84 = vmatprep.subr.mxu0 0.0
    %85 = vmatpush1.msra.mxu0 0.0
    %86 = vmatprep.subr.mxu0 0.0
    %87 = vmatpush1.msra.mxu0 0.0
    %88 = vmatprep.subr.mxu0 0.0
    %89 = vmatpush1.msra.mxu0 0.0
    %90 = vmatprep.subr.mxu0 0.0
    %91 = vmatpush1.msra.mxu0 0.0
    %92 = vmatprep.subr.mxu0 0.0
    %93 = vmatpush1.msra.mxu0 0.0
    %94 = vmatprep.subr.mxu0 0.0
    %95 = vmatpush1.msra.mxu0 0.0
    %96 = vmatprep.subr.mxu0 0.0
    %97 = vmatpush1.msra.mxu0 0.0
    %98 = vmatprep.subr.mxu0 0.0
    %99 = vmatpush1.msra.mxu0 0.0
    %100 = vmatprep.subr.mxu0 0.0
    %101 = vmatpush1.msra.mxu0 0.0
    %102 = vmatprep.subr.mxu0 0.0
    %103 = vmatpush1.msra.mxu0 0.0
    %104 = vmatprep.subr.mxu0 0.0
    %105 = vmatpush1.msra.mxu0 0.0
    %106 = vmatprep.subr.mxu0 0.0
    %107 = vmatpush1.msra.mxu0 0.0
    %108 = vmatprep.subr.mxu0 0.0
    %109 = vmatpush1.msra.mxu0 0.0
    %110 = vmatprep.subr.mxu0 0.0
    %111 = vmatpush1.msra.mxu0 0.0
    %112 = vmatprep.subr.mxu0 0.0
    %113 = vmatpush1.msra.mxu0 0.0
    %114 = vmatprep.subr.mxu0 0.0
    %115 = vmatpush1.msra.mxu0 0.0
    %116 = vmatprep.subr.mxu0 0.0
    %117 = vmatpush1.msra.mxu0 0.0
    %118 = vmatprep.subr.mxu0 0.0
    %119 = vmatpush1.msra.mxu0 0.0
    %120 = vmatprep.subr.mxu0 0.0
    %121 = vmatpush1.msra.mxu0 0.0
    %122 = vmatprep.subr.mxu0 0.0
    %123 = vmatpush1.msra.mxu0 0.0
    %124 = vmatprep.subr.mxu0 0.0
    %125 = vmatpush1.msra.mxu0 0.0
    %126 = vmatprep.subr.mxu0 0.0
    %127 = vmatpush1.msra.mxu0 0.0
    %128 = vmatprep.subr.mxu0 0.0
    %129 = vmatpush1.msra.mxu0 0.0
    %130 = vmatprep.subr.mxu0 0.0
    %131 = vmatpush1.msra.mxu0 0.0
    %132 = vmatprep.subr.mxu0 0.0
    %133 = vmatpush1.msra.mxu0 0.0
    %134 = vmatprep.subr.mxu0 0.0
    %135 = vmatpush1.msra.mxu0 0.0
    %136 = vmatprep.subr.mxu0 0.0
    %137 = vmatpush1.msra.mxu0 0.0
    %138 = vmatprep.subr.mxu0 0.0
    %139 = vmatpush1.msra.mxu0 0.0
    %140 = vmatprep.subr.mxu0 0.0
    %141 = vmatpush1.msra.mxu0 0.0
    %142 = vmatprep.subr.mxu0 0.0
    %143 = vmatpush1.msra.mxu0 0.0
    %144 = vmatprep.mubr.f32.mxu0 0.0
    %145 = vmatmul.mubr.f32.gmra.mrb[0].mxu0 %v75
    %v146 = vpop.f32.mrb[0].mxu0
    %v147 = vadd.f32 %v72, %v146
    %v148 = vpop.f32.mrb[0].mxu0
    %149 = vmatprep.mubr.f32.mxu0 0.0
    %150 = vmatmul.mubr.f32.gmra.mrb[0].mxu0 %v78
    %v151 = vpop.f32.mrb[0].mxu0
    %v152 = vadd.f32 %v72, %v151
    %v153 = vpop.f32.mrb[0].mxu0
    %154 = vdwg.mxu0
    %v155 = vxor.u32 %v147, 2147483648
    %v156 = vmul.f32 %v155, 1.442695
    %v157 = vpow.pop %v156
    %v158 = vadd.f32 %v157, 1.0
    %v159 = vrcp.pop %v158
    %v160 = vmul.f32 1.0, %v159
    %v161 = vlaneseq
    %v162 = vshrl.u32 %v161, 7
    %v163 = vsub.s32 1, %v162
    %v164 = vrot.slane %v32, %v163
    %v165 = vmul.f32 %v160, %v164
    %167 = vrot.lane.b32.xlu0 %v165, 64
    %v168 = vpop.permute.xlu0 %167
    %v170 = vadd.f32 %v147, %v168
    %v171 = vtanh.pop %v170
    %v172 = vsub.f32 1.0, %v160
    %174 = vrot.lane.b32.xlu0 %v171, 96
    %v175 = vpop.permute.xlu0 %174
    %v177 = vmul.f32 %v172, %v175
    %v178 = vmul.f32 %v160, 0.0
    %v179 = vadd.f32 %v177, %v178
    %180 = vset.pattern.permute.xlu0 4
    %181 = vperm.xlu0 %180, %v33
    %v182 = vpop.permute.xlu0 %181
    %v184 = vmul.f32 %v182, %v179
    %186 = vrot.lane.b32.xlu0 %v184, 96
    %v187 = vpop.permute.xlu0 %186
    %vm188 = vcmask 261120
    %v189 = vsel %vm188, %v187, 0
    %191 = vmatprep.subr.mxu0 0.0
    %192 = vmatpush1.msra.mxu0 %v37
    %193 = vmatprep.subr.mxu0 0.0
    %194 = vmatpush1.msra.mxu0 %v38
    %195 = vmatprep.subr.mxu0 0.0
    %196 = vmatpush1.msra.mxu0 %v39
    %197 = vmatprep.subr.mxu0 0.0
    %198 = vmatpush1.msra.mxu0 %v40
    %199 = vmatprep.subr.mxu0 0.0
    %200 = vmatpush1.msra.mxu0 0.0
    %201 = vmatprep.subr.mxu0 0.0
    %202 = vmatpush1.msra.mxu0 0.0
    %203 = vmatprep.subr.mxu0 0.0
    %204 = vmatpush1.msra.mxu0 0.0
    %205 = vmatprep.subr.mxu0 0.0
    %206 = vmatpush1.msra.mxu0 0.0
    %207 = vmatprep.subr.mxu0 0.0
    %208 = vmatpush1.msra.mxu0 0.0
    %209 = vmatprep.subr.mxu0 0.0
    %210 = vmatpush1.msra.mxu0 0.0
    %211 = vmatprep.subr.mxu0 0.0
    %212 = vmatpush1.msra.mxu0 0.0
    %213 = vmatprep.subr.mxu0 0.0
    %214 = vmatpush1.msra.mxu0 0.0
    %215 = vmatprep.subr.mxu0 0.0
    %216 = vmatpush1.msra.mxu0 0.0
    %217 = vmatprep.subr.mxu0 0.0
    %218 = vmatpush1.msra.mxu0 0.0
    %219 = vmatprep.subr.mxu0 0.0
    %220 = vmatpush1.msra.mxu0 0.0
    %221 = vmatprep.subr.mxu0 0.0
    %222 = vmatpush1.msra.mxu0 0.0
    %223 = vmatprep.subr.mxu0 0.0
    %224 = vmatpush1.msra.mxu0 0.0
    %225 = vmatprep.subr.mxu0 0.0
    %226 = vmatpush1.msra.mxu0 0.0
    %227 = vmatprep.subr.mxu0 0.0
    %228 = vmatpush1.msra.mxu0 0.0
    %229 = vmatprep.subr.mxu0 0.0
    %230 = vmatpush1.msra.mxu0 0.0
    %231 = vmatprep.subr.mxu0 0.0
    %232 = vmatpush1.msra.mxu0 0.0
    %233 = vmatprep.subr.mxu0 0.0
    %234 = vmatpush1.msra.mxu0 0.0
    %235 = vmatprep.subr.mxu0 0.0
    %236 = vmatpush1.msra.mxu0 0.0
    %237 = vmatprep.subr.mxu0 0.0
    %238 = vmatpush1.msra.mxu0 0.0
    %239 = vmatprep.subr.mxu0 0.0
    %240 = vmatpush1.msra.mxu0 0.0
    %241 = vmatprep.subr.mxu0 0.0
    %242 = vmatpush1.msra.mxu0 0.0
    %243 = vmatprep.subr.mxu0 0.0
    %244 = vmatpush1.msra.mxu0 0.0
    %245 = vmatprep.subr.mxu0 0.0
    %246 = vmatpush1.msra.mxu0 0.0
    %247 = vmatprep.subr.mxu0 0.0
    %248 = vmatpush1.msra.mxu0 0.0
    %249 = vmatprep.subr.mxu0 0.0
    %250 = vmatpush1.msra.mxu0 0.0
    %251 = vmatprep.subr.mxu0 0.0
    %252 = vmatpush1.msra.mxu0 0.0
    %253 = vmatprep.subr.mxu0 0.0
    %254 = vmatpush1.msra.mxu0 0.0
    %255 = vmatprep.mubr.f32.mxu0 0.0
    %256 = vmatmul.mubr.f32.gmra.mrb[0].mxu0 %v189
    %v257 = vpop.f32.mrb[0].mxu0
    %v258 = vadd.f32 0.0, %v257
    %v259 = vpop.f32.mrb[0].mxu0
    %260 = vdwg.mxu0
    %v262 = vrot.slane %v258, 6
    %v264 = vadd.f32 %v147, %v262
    %266 = vrot.lane.b32.xlu0 %v164, 64
    %v267 = vpop.permute.xlu0 %266
    %v269 = vadd.f32 %v258, %v267
    %v270 = vxor.u32 %v264, 2147483648
    %v271 = vmul.f32 %v270, 1.442695
    %v272 = vpow.pop %v271
    %v273 = vadd.f32 %v272, 1.0
    %v274 = vrcp.pop %v273
    %v275 = vmul.f32 1.0, %v274
    %v277 = vrot.slane %v269, 6
    %278 = vrot.lane.b32.xlu0 %v277, 64
    %v279 = vpop.permute.xlu0 %278
    %v281 = vmul.f32 %v275, %v279
    %283 = vrot.lane.b32.xlu0 %v281, 64
    %v284 = vpop.permute.xlu0 %283
    %v286 = vadd.f32 %v147, %v284
    %v287 = vtanh.pop %v286
    %v288 = vsub.f32 1.0, %v275
    %290 = vrot.lane.b32.xlu0 %v287, 96
    %v291 = vpop.permute.xlu0 %290
    %v293 = vmul.f32 %v288, %v291
    %v294 = vrot.slane %v184, 6
    %v296 = vmul.f32 %v275, %v294
    %v297 = vadd.f32 %v293, %v296
    %v298 = vmul.f32 %v182, %v297
    %v299 = vsub.f32 1.0, %v33
    %301 = vset.pattern.permute.xlu0 4
    %302 = vperm.xlu0 %301, %v299
    %v303 = vpop.permute.xlu0 %302
    %305 = vrot.lane.b32.xlu0 %v294, 96
    %v306 = vpop.permute.xlu0 %305
    %v308 = vmul.f32 %v303, %v306
    %310 = vrot.lane.b32.xlu0 %v308, 32
    %v311 = vpop.permute.xlu0 %310
    %v313 = vadd.f32 %v298, %v311
    %v315 = vrot.slane %v313, 2
    %316 = vrot.lane.b32.xlu0 %v315, 96
    %v317 = vpop.permute.xlu0 %316
    %v318 = vsel %vm188, %v317, 0
    %320 = vmatprep.subr.mxu0 0.0
    %321 = vmatpush1.msra.mxu0 %v37
    %322 = vmatprep.subr.mxu0 0.0
    %323 = vmatpush1.msra.mxu0 %v38
    %324 = vmatprep.subr.mxu0 0.0
    %325 = vmatpush1.msra.mxu0 %v39
    %326 = vmatprep.subr.mxu0 0.0
    %327 = vmatpush1.msra.mxu0 %v40
    %328 = vmatprep.subr.mxu0 0.0
    %329 = vmatpush1.msra.mxu0 0.0
    %330 = vmatprep.subr.mxu0 0.0
    %331 = vmatpush1.msra.mxu0 0.0
    %332 = vmatprep.subr.mxu0 0.0
    %333 = vmatpush1.msra.mxu0 0.0
    %334 = vmatprep.subr.mxu0 0.0
    %335 = vmatpush1.msra.mxu0 0.0
    %336 = vmatprep.subr.mxu0 0.0
    %337 = vmatpush1.msra.mxu0 0.0
    %338 = vmatprep.subr.mxu0 0.0
    %339 = vmatpush1.msra.mxu0 0.0
    %340 = vmatprep.subr.mxu0 0.0
    %341 = vmatpush1.msra.mxu0 0.0
    %342 = vmatprep.subr.mxu0 0.0
    %343 = vmatpush1.msra.mxu0 0.0
    %344 = vmatprep.subr.mxu0 0.0
    %345 = vmatpush1.msra.mxu0 0.0
    %346 = vmatprep.subr.mxu0 0.0
    %347 = vmatpush1.msra.mxu0 0.0
    %348 = vmatprep.subr.mxu0 0.0
    %349 = vmatpush1.msra.mxu0 0.0
    %350 = vmatprep.subr.mxu0 0.0
    %351 = vmatpush1.msra.mxu0 0.0
    %352 = vmatprep.subr.mxu0 0.0
    %353 = vmatpush1.msra.mxu0 0.0
    %354 = vmatprep.subr.mxu0 0.0
    %355 = vmatpush1.msra.mxu0 0.0
    %356 = vmatprep.subr.mxu0 0.0
    %357 = vmatpush1.msra.mxu0 0.0
    %358 = vmatprep.subr.mxu0 0.0
    %359 = vmatpush1.msra.mxu0 0.0
    %360 = vmatprep.subr.mxu0 0.0
    %361 = vmatpush1.msra.mxu0 0.0
    %362 = vmatprep.subr.mxu0 0.0
    %363 = vmatpush1.msra.mxu0 0.0
    %364 = vmatprep.subr.mxu0 0.0
    %365 = vmatpush1.msra.mxu0 0.0
    %366 = vmatprep.subr.mxu0 0.0
    %367 = vmatpush1.msra.mxu0 0.0
    %368 = vmatprep.subr.mxu0 0.0
    %369 = vmatpush1.msra.mxu0 0.0
    %370 = vmatprep.subr.mxu0 0.0
    %371 = vmatpush1.msra.mxu0 0.0
    %372 = vmatprep.subr.mxu0 0.0
    %373 = vmatpush1.msra.mxu0 0.0
    %374 = vmatprep.subr.mxu0 0.0
    %375 = vmatpush1.msra.mxu0 0.0
    %376 = vmatprep.subr.mxu0 0.0
    %377 = vmatpush1.msra.mxu0 0.0
    %378 = vmatprep.subr.mxu0 0.0
    %379 = vmatpush1.msra.mxu0 0.0
    %380 = vmatprep.subr.mxu0 0.0
    %381 = vmatpush1.msra.mxu0 0.0
    %382 = vmatprep.subr.mxu0 0.0
    %383 = vmatpush1.msra.mxu0 0.0
    %384 = vmatprep.mubr.f32.mxu0 0.0
    %385 = vmatmul.mubr.f32.gmra.mrb[0].mxu0 %v318
    %v386 = vpop.f32.mrb[0].mxu0
    %v387 = vadd.f32 0.0, %v386
    %v388 = vpop.f32.mrb[0].mxu0
    %389 = vdwg.mxu0
    %v391 = vrot.slane %v387, 4
    %v393 = vadd.f32 %v147, %v391
    %v394 = vadd.f32 %v387, %v267
    %v395 = vxor.u32 %v393, 2147483648
    %v396 = vmul.f32 %v395, 1.442695
    %v397 = vpow.pop %v396
    %v398 = vadd.f32 %v397, 1.0
    %v399 = vrcp.pop %v398
    %v400 = vmul.f32 1.0, %v399
    %v402 = vrot.slane %v394, 4
    %403 = vrot.lane.b32.xlu0 %v402, 64
    %v404 = vpop.permute.xlu0 %403
    %v406 = vmul.f32 %v400, %v404
    %408 = vrot.lane.b32.xlu0 %v406, 64
    %v409 = vpop.permute.xlu0 %408
    %v411 = vadd.f32 %v147, %v409
    %v412 = vtanh.pop %v411
    %v413 = vsub.f32 1.0, %v400
    %415 = vrot.lane.b32.xlu0 %v412, 96
    %v416 = vpop.permute.xlu0 %415
    %v418 = vmul.f32 %v413, %v416
    %v419 = vrot.slane %v313, 6
    %v421 = vmul.f32 %v400, %v419
    %v422 = vadd.f32 %v418, %v421
    %v423 = vmul.f32 %v182, %v422
    %424 = vrot.lane.b32.xlu0 %v419, 96
    %v425 = vpop.permute.xlu0 %424
    %v427 = vmul.f32 %v303, %v425
    %429 = vrot.lane.b32.xlu0 %v427, 32
    %v430 = vpop.permute.xlu0 %429
    %v432 = vadd.f32 %v423, %v430
    %v434 = vrot.slane %v432, 4
    %435 = vrot.lane.b32.xlu0 %v434, 96
    %v436 = vpop.permute.xlu0 %435
    %v437 = vsel %vm188, %v436, 0
    %439 = vmatprep.subr.mxu0 0.0
    %440 = vmatpush1.msra.mxu0 %v37
    %441 = vmatprep.subr.mxu0 0.0
    %442 = vmatpush1.msra.mxu0 %v38
    %443 = vmatprep.subr.mxu0 0.0
    %444 = vmatpush1.msra.mxu0 %v39
    %445 = vmatprep.subr.mxu0 0.0
    %446 = vmatpush1.msra.mxu0 %v40
    %447 = vmatprep.subr.mxu0 0.0
    %448 = vmatpush1.msra.mxu0 0.0
    %449 = vmatprep.subr.mxu0 0.0
    %450 = vmatpush1.msra.mxu0 0.0
    %451 = vmatprep.subr.mxu0 0.0
    %452 = vmatpush1.msra.mxu0 0.0
    %453 = vmatprep.subr.mxu0 0.0
    %454 = vmatpush1.msra.mxu0 0.0
    %455 = vmatprep.subr.mxu0 0.0
    %456 = vmatpush1.msra.mxu0 0.0
    %457 = vmatprep.subr.mxu0 0.0
    %458 = vmatpush1.msra.mxu0 0.0
    %459 = vmatprep.subr.mxu0 0.0
    %460 = vmatpush1.msra.mxu0 0.0
    %461 = vmatprep.subr.mxu0 0.0
    %462 = vmatpush1.msra.mxu0 0.0
    %463 = vmatprep.subr.mxu0 0.0
    %464 = vmatpush1.msra.mxu0 0.0
    %465 = vmatprep.subr.mxu0 0.0
    %466 = vmatpush1.msra.mxu0 0.0
    %467 = vmatprep.subr.mxu0 0.0
    %468 = vmatpush1.msra.mxu0 0.0
    %469 = vmatprep.subr.mxu0 0.0
    %470 = vmatpush1.msra.mxu0 0.0
    %471 = vmatprep.subr.mxu0 0.0
    %472 = vmatpush1.msra.mxu0 0.0
    %473 = vmatprep.subr.mxu0 0.0
    %474 = vmatpush1.msra.mxu0 0.0
    %475 = vmatprep.subr.mxu0 0.0
    %476 = vmatpush1.msra.mxu0 0.0
    %477 = vmatprep.subr.mxu0 0.0
    %478 = vmatpush1.msra.mxu0 0.0
    %479 = vmatprep.subr.mxu0 0.0
    %480 = vmatpush1.msra.mxu0 0.0
    %481 = vmatprep.subr.mxu0 0.0
    %482 = vmatpush1.msra.mxu0 0.0
    %483 = vmatprep.subr.mxu0 0.0
    %484 = vmatpush1.msra.mxu0 0.0
    %485 = vmatprep.subr.mxu0 0.0
    %486 = vmatpush1.msra.mxu0 0.0
    %487 = vmatprep.subr.mxu0 0.0
    %488 = vmatpush1.msra.mxu0 0.0
    %489 = vmatprep.subr.mxu0 0.0
    %490 = vmatpush1.msra.mxu0 0.0
    %491 = vmatprep.subr.mxu0 0.0
    %492 = vmatpush1.msra.mxu0 0.0
    %493 = vmatprep.subr.mxu0 0.0
    %494 = vmatpush1.msra.mxu0 0.0
    %495 = vmatprep.subr.mxu0 0.0
    %496 = vmatpush1.msra.mxu0 0.0
    %497 = vmatprep.subr.mxu0 0.0
    %498 = vmatpush1.msra.mxu0 0.0
    %499 = vmatprep.subr.mxu0 0.0
    %500 = vmatpush1.msra.mxu0 0.0
    %501 = vmatprep.subr.mxu0 0.0
    %502 = vmatpush1.msra.mxu0 0.0
    %503 = vmatprep.mubr.f32.mxu0 0.0
    %504 = vmatmul.mubr.f32.gmra.mrb[0].mxu0 %v437
    %v505 = vpop.f32.mrb[0].mxu0
    %v506 = vadd.f32 0.0, %v505
    %v507 = vpop.f32.mrb[0].mxu0
    %508 = vdwg.mxu0
    %v510 = vrot.slane %v506, 2
    %v512 = vadd.f32 %v147, %v510
    %v513 = vadd.f32 %v506, %v267
    %v514 = vxor.u32 %v512, 2147483648
    %v515 = vmul.f32 %v514, 1.442695
    %v516 = vpow.pop %v515
    %v517 = vadd.f32 %v516, 1.0
    %v518 = vrcp.pop %v517
    %v519 = vmul.f32 1.0, %v518
    %v521 = vrot.slane %v513, 2
    %522 = vrot.lane.b32.xlu0 %v521, 64
    %v523 = vpop.permute.xlu0 %522
    %v525 = vmul.f32 %v519, %v523
    %527 = vrot.lane.b32.xlu0 %v525, 64
    %v528 = vpop.permute.xlu0 %527
    %v530 = vadd.f32 %v147, %v528
    %v531 = vtanh.pop %v530
    %v532 = vsub.f32 1.0, %v519
    %534 = vrot.lane.b32.xlu0 %v531, 96
    %v535 = vpop.permute.xlu0 %534
    %v537 = vmul.f32 %v532, %v535
    %v538 = vrot.slane %v432, 6
    %v540 = vmul.f32 %v519, %v538
    %v541 = vadd.f32 %v537, %v540
    %v542 = vmul.f32 %v182, %v541
    %543 = vrot.lane.b32.xlu0 %v538, 96
    %v544 = vpop.permute.xlu0 %543
    %v546 = vmul.f32 %v303, %v544
    %548 = vrot.lane.b32.xlu0 %v546, 32
    %v549 = vpop.permute.xlu0 %548
    %v551 = vadd.f32 %v542, %v549
    %v553 = vrot.slane %v551, 6
    %554 = vrot.lane.b32.xlu0 %v553, 96
    %v555 = vpop.permute.xlu0 %554
    %v556 = vsel %vm188, %v555, 0
    %558 = vmatprep.subr.mxu0 0.0
    %559 = vmatpush1.msra.mxu0 %v37
    %560 = vmatprep.subr.mxu0 0.0
    %561 = vmatpush1.msra.mxu0 %v38
    %562 = vmatprep.subr.mxu0 0.0
    %563 = vmatpush1.msra.mxu0 %v39
    %564 = vmatprep.subr.mxu0 0.0
    %565 = vmatpush1.msra.mxu0 %v40
    %566 = vmatprep.subr.mxu0 0.0
    %567 = vmatpush1.msra.mxu0 0.0
    %568 = vmatprep.subr.mxu0 0.0
    %569 = vmatpush1.msra.mxu0 0.0
    %570 = vmatprep.subr.mxu0 0.0
    %571 = vmatpush1.msra.mxu0 0.0
    %572 = vmatprep.subr.mxu0 0.0
    %573 = vmatpush1.msra.mxu0 0.0
    %574 = vmatprep.subr.mxu0 0.0
    %575 = vmatpush1.msra.mxu0 0.0
    %576 = vmatprep.subr.mxu0 0.0
    %577 = vmatpush1.msra.mxu0 0.0
    %578 = vmatprep.subr.mxu0 0.0
    %579 = vmatpush1.msra.mxu0 0.0
    %580 = vmatprep.subr.mxu0 0.0
    %581 = vmatpush1.msra.mxu0 0.0
    %582 = vmatprep.subr.mxu0 0.0
    %583 = vmatpush1.msra.mxu0 0.0
    %584 = vmatprep.subr.mxu0 0.0
    %585 = vmatpush1.msra.mxu0 0.0
    %586 = vmatprep.subr.mxu0 0.0
    %587 = vmatpush1.msra.mxu0 0.0
    %588 = vmatprep.subr.mxu0 0.0
    %589 = vmatpush1.msra.mxu0 0.0
    %590 = vmatprep.subr.mxu0 0.0
    %591 = vmatpush1.msra.mxu0 0.0
    %592 = vmatprep.subr.mxu0 0.0
    %593 = vmatpush1.msra.mxu0 0.0
    %594 = vmatprep.subr.mxu0 0.0
    %595 = vmatpush1.msra.mxu0 0.0
    %596 = vmatprep.subr.mxu0 0.0
    %597 = vmatpush1.msra.mxu0 0.0
    %598 = vmatprep.subr.mxu0 0.0
    %599 = vmatpush1.msra.mxu0 0.0
    %600 = vmatprep.subr.mxu0 0.0
    %601 = vmatpush1.msra.mxu0 0.0
    %602 = vmatprep.subr.mxu0 0.0
    %603 = vmatpush1.msra.mxu0 0.0
    %604 = vmatprep.subr.mxu0 0.0
    %605 = vmatpush1.msra.mxu0 0.0
    %606 = vmatprep.subr.mxu0 0.0
    %607 = vmatpush1.msra.mxu0 0.0
    %608 = vmatprep.subr.mxu0 0.0
    %609 = vmatpush1.msra.mxu0 0.0
    %610 = vmatprep.subr.mxu0 0.0
    %611 = vmatpush1.msra.mxu0 0.0
    %612 = vmatprep.subr.mxu0 0.0
    %613 = vmatpush1.msra.mxu0 0.0
    %614 = vmatprep.subr.mxu0 0.0
    %615 = vmatpush1.msra.mxu0 0.0
    %616 = vmatprep.subr.mxu0 0.0
    %617 = vmatpush1.msra.mxu0 0.0
    %618 = vmatprep.subr.mxu0 0.0
    %619 = vmatpush1.msra.mxu0 0.0
    %620 = vmatprep.subr.mxu0 0.0
    %621 = vmatpush1.msra.mxu0 0.0
    %622 = vmatprep.mubr.f32.mxu0 0.0
    %623 = vmatmul.mubr.f32.gmra.mrb[0].mxu0 %v556
    %v624 = vpop.f32.mrb[0].mxu0
    %v625 = vadd.f32 0.0, %v624
    %v626 = vpop.f32.mrb[0].mxu0
    %627 = vdwg.mxu0
    %v628 = vadd.f32 %v152, %v625
    %v629 = vadd.f32 %v625, %v267
    %v630 = vxor.u32 %v628, 2147483648
    %v631 = vmul.f32 %v630, 1.442695
    %v632 = vpow.pop %v631
    %v633 = vadd.f32 %v632, 1.0
    %v634 = vrcp.pop %v633
    %v635 = vmul.f32 1.0, %v634
    %637 = vrot.lane.b32.xlu0 %v629, 64
    %v638 = vpop.permute.xlu0 %637
    %v640 = vmul.f32 %v635, %v638
    %642 = vrot.lane.b32.xlu0 %v640, 64
    %v643 = vpop.permute.xlu0 %642
    %v645 = vadd.f32 %v152, %v643
    %v646 = vtanh.pop %v645
    %v647 = vsub.f32 1.0, %v635
    %649 = vrot.lane.b32.xlu0 %v646, 96
    %v650 = vpop.permute.xlu0 %649
    %v652 = vmul.f32 %v647, %v650
    %v654 = vmul.f32 %v635, %v553
    %v655 = vadd.f32 %v652, %v654
    %656 = vset.pattern.permute.xlu0 4
    %657 = vperm.xlu0 %656, %v34
    %v658 = vpop.permute.xlu0 %657
    %v660 = vmul.f32 %v658, %v655
    %v661 = vsub.f32 1.0, %v34
    %663 = vset.pattern.permute.xlu0 4
    %664 = vperm.xlu0 %663, %v661
    %v665 = vpop.permute.xlu0 %664
    %v668 = vmul.f32 %v665, %v555
    %670 = vrot.lane.b32.xlu0 %v668, 32
    %v671 = vpop.permute.xlu0 %670
    %v673 = vadd.f32 %v660, %v671
    %675 = vrot.lane.b32.xlu0 %v673, 96
    %v676 = vpop.permute.xlu0 %675
    %v677 = vsel %vm188, %v676, 0
    %679 = vmatprep.subr.mxu0 0.0
    %680 = vmatpush1.msra.mxu0 %v37
    %681 = vmatprep.subr.mxu0 0.0
    %682 = vmatpush1.msra.mxu0 %v38
    %683 = vmatprep.subr.mxu0 0.0
    %684 = vmatpush1.msra.mxu0 %v39
    %685 = vmatprep.subr.mxu0 0.0
    %686 = vmatpush1.msra.mxu0 %v40
    %687 = vmatprep.subr.mxu0 0.0
    %688 = vmatpush1.msra.mxu0 0.0
    %689 = vmatprep.subr.mxu0 0.0
    %690 = vmatpush1.msra.mxu0 0.0
    %691 = vmatprep.subr.mxu0 0.0
    %692 = vmatpush1.msra.mxu0 0.0
    %693 = vmatprep.subr.mxu0 0.0
    %694 = vmatpush1.msra.mxu0 0.0
    %695 = vmatprep.subr.mxu0 0.0
    %696 = vmatpush1.msra.mxu0 0.0
    %697 = vmatprep.subr.mxu0 0.0
    %698 = vmatpush1.msra.mxu0 0.0
    %699 = vmatprep.subr.mxu0 0.0
    %700 = vmatpush1.msra.mxu0 0.0
    %701 = vmatprep.subr.mxu0 0.0
    %702 = vmatpush1.msra.mxu0 0.0
    %703 = vmatprep.subr.mxu0 0.0
    %704 = vmatpush1.msra.mxu0 0.0
    %705 = vmatprep.subr.mxu0 0.0
    %706 = vmatpush1.msra.mxu0 0.0
    %707 = vmatprep.subr.mxu0 0.0
    %708 = vmatpush1.msra.mxu0 0.0
    %709 = vmatprep.subr.mxu0 0.0
    %710 = vmatpush1.msra.mxu0 0.0
    %711 = vmatprep.subr.mxu0 0.0
    %712 = vmatpush1.msra.mxu0 0.0
    %713 = vmatprep.subr.mxu0 0.0
    %714 = vmatpush1.msra.mxu0 0.0
    %715 = vmatprep.subr.mxu0 0.0
    %716 = vmatpush1.msra.mxu0 0.0
    %717 = vmatprep.subr.mxu0 0.0
    %718 = vmatpush1.msra.mxu0 0.0
    %719 = vmatprep.subr.mxu0 0.0
    %720 = vmatpush1.msra.mxu0 0.0
    %721 = vmatprep.subr.mxu0 0.0
    %722 = vmatpush1.msra.mxu0 0.0
    %723 = vmatprep.subr.mxu0 0.0
    %724 = vmatpush1.msra.mxu0 0.0
    %725 = vmatprep.subr.mxu0 0.0
    %726 = vmatpush1.msra.mxu0 0.0
    %727 = vmatprep.subr.mxu0 0.0
    %728 = vmatpush1.msra.mxu0 0.0
    %729 = vmatprep.subr.mxu0 0.0
    %730 = vmatpush1.msra.mxu0 0.0
    %731 = vmatprep.subr.mxu0 0.0
    %732 = vmatpush1.msra.mxu0 0.0
    %733 = vmatprep.subr.mxu0 0.0
    %734 = vmatpush1.msra.mxu0 0.0
    %735 = vmatprep.subr.mxu0 0.0
    %736 = vmatpush1.msra.mxu0 0.0
    %737 = vmatprep.subr.mxu0 0.0
    %738 = vmatpush1.msra.mxu0 0.0
    %739 = vmatprep.subr.mxu0 0.0
    %740 = vmatpush1.msra.mxu0 0.0
    %741 = vmatprep.subr.mxu0 0.0
    %742 = vmatpush1.msra.mxu0 0.0
    %743 = vmatprep.mubr.f32.mxu0 0.0
    %744 = vmatmul.mubr.f32.gmra.mrb[0].mxu0 %v677
    %v745 = vpop.f32.mrb[0].mxu0
    %v746 = vadd.f32 0.0, %v745
    %v747 = vpop.f32.mrb[0].mxu0
    %748 = vdwg.mxu0
    %v750 = vrot.slane %v746, 6
    %v752 = vadd.f32 %v152, %v750
    %v753 = vadd.f32 %v746, %v267
    %v754 = vxor.u32 %v752, 2147483648
    %v755 = vmul.f32 %v754, 1.442695
    %v756 = vpow.pop %v755
    %v757 = vadd.f32 %v756, 1.0
    %v758 = vrcp.pop %v757
    %v759 = vmul.f32 1.0, %v758
    %v761 = vrot.slane %v753, 6
    %762 = vrot.lane.b32.xlu0 %v761, 64
    %v763 = vpop.permute.xlu0 %762
    %v765 = vmul.f32 %v759, %v763
    %767 = vrot.lane.b32.xlu0 %v765, 64
    %v768 = vpop.permute.xlu0 %767
    %v770 = vadd.f32 %v152, %v768
    %v771 = vtanh.pop %v770
    %v772 = vsub.f32 1.0, %v759
    %774 = vrot.lane.b32.xlu0 %v771, 96
    %v775 = vpop.permute.xlu0 %774
    %v777 = vmul.f32 %v772, %v775
    %v778 = vrot.slane %v673, 6
    %v780 = vmul.f32 %v759, %v778
    %v781 = vadd.f32 %v777, %v780
    %v782 = vmul.f32 %v658, %v781
    %783 = vrot.lane.b32.xlu0 %v778, 96
    %v784 = vpop.permute.xlu0 %783
    %v786 = vmul.f32 %v665, %v784
    %788 = vrot.lane.b32.xlu0 %v786, 32
    %v789 = vpop.permute.xlu0 %788
    %v791 = vadd.f32 %v782, %v789
    %v793 = vrot.slane %v791, 2
    %794 = vrot.lane.b32.xlu0 %v793, 96
    %v795 = vpop.permute.xlu0 %794
    %v796 = vsel %vm188, %v795, 0
    %798 = vmatprep.subr.mxu0 0.0
    %799 = vmatpush1.msra.mxu0 %v37
    %800 = vmatprep.subr.mxu0 0.0
    %801 = vmatpush1.msra.mxu0 %v38
    %802 = vmatprep.subr.mxu0 0.0
    %803 = vmatpush1.msra.mxu0 %v39
    %804 = vmatprep.subr.mxu0 0.0
    %805 = vmatpush1.msra.mxu0 %v40
    %806 = vmatprep.subr.mxu0 0.0
    %807 = vmatpush1.msra.mxu0 0.0
    %808 = vmatprep.subr.mxu0 0.0
    %809 = vmatpush1.msra.mxu0 0.0
    %810 = vmatprep.subr.mxu0 0.0
    %811 = vmatpush1.msra.mxu0 0.0
    %812 = vmatprep.subr.mxu0 0.0
    %813 = vmatpush1.msra.mxu0 0.0
    %814 = vmatprep.subr.mxu0 0.0
    %815 = vmatpush1.msra.mxu0 0.0
    %816 = vmatprep.subr.mxu0 0.0
    %817 = vmatpush1.msra.mxu0 0.0
    %818 = vmatprep.subr.mxu0 0.0
    %819 = vmatpush1.msra.mxu0 0.0
    %820 = vmatprep.subr.mxu0 0.0
    %821 = vmatpush1.msra.mxu0 0.0
    %822 = vmatprep.subr.mxu0 0.0
    %823 = vmatpush1.msra.mxu0 0.0
    %824 = vmatprep.subr.mxu0 0.0
    %825 = vmatpush1.msra.mxu0 0.0
    %826 = vmatprep.subr.mxu0 0.0
    %827 = vmatpush1.msra.mxu0 0.0
    %828 = vmatprep.subr.mxu0 0.0
    %829 = vmatpush1.msra.mxu0 0.0
    %830 = vmatprep.subr.mxu0 0.0
    %831 = vmatpush1.msra.mxu0 0.0
    %832 = vmatprep.subr.mxu0 0.0
    %833 = vmatpush1.msra.mxu0 0.0
    %834 = vmatprep.subr.mxu0 0.0
    %835 = vmatpush1.msra.mxu0 0.0
    %836 = vmatprep.subr.mxu0 0.0
    %837 = vmatpush1.msra.mxu0 0.0
    %838 = vmatprep.subr.mxu0 0.0
    %839 = vmatpush1.msra.mxu0 0.0
    %840 = vmatprep.subr.mxu0 0.0
    %841 = vmatpush1.msra.mxu0 0.0
    %842 = vmatprep.subr.mxu0 0.0
    %843 = vmatpush1.msra.mxu0 0.0
    %844 = vmatprep.subr.mxu0 0.0
    %845 = vmatpush1.msra.mxu0 0.0
    %846 = vmatprep.subr.mxu0 0.0
    %847 = vmatpush1.msra.mxu0 0.0
    %848 = vmatprep.subr.mxu0 0.0
    %849 = vmatpush1.msra.mxu0 0.0
    %850 = vmatprep.subr.mxu0 0.0
    %851 = vmatpush1.msra.mxu0 0.0
    %852 = vmatprep.subr.mxu0 0.0
    %853 = vmatpush1.msra.mxu0 0.0
    %854 = vmatprep.subr.mxu0 0.0
    %855 = vmatpush1.msra.mxu0 0.0
    %856 = vmatprep.subr.mxu0 0.0
    %857 = vmatpush1.msra.mxu0 0.0
    %858 = vmatprep.subr.mxu0 0.0
    %859 = vmatpush1.msra.mxu0 0.0
    %860 = vmatprep.subr.mxu0 0.0
    %861 = vmatpush1.msra.mxu0 0.0
    %862 = vmatprep.mubr.f32.mxu0 0.0
    %863 = vmatmul.mubr.f32.gmra.mrb[0].mxu0 %v796
    %v864 = vpop.f32.mrb[0].mxu0
    %v865 = vadd.f32 0.0, %v864
    %v866 = vpop.f32.mrb[0].mxu0
    %867 = vdwg.mxu0
    %v869 = vrot.slane %v865, 4
    %v871 = vadd.f32 %v152, %v869
    %v872 = vadd.f32 %v865, %v267
    %v873 = vxor.u32 %v871, 2147483648
    %v874 = vmul.f32 %v873, 1.442695
    %v875 = vpow.pop %v874
    %v876 = vadd.f32 %v875, 1.0
    %v877 = vrcp.pop %v876
    %v878 = vmul.f32 1.0, %v877
    %v880 = vrot.slane %v872, 4
    %881 = vrot.lane.b32.xlu0 %v880, 64
    %v882 = vpop.permute.xlu0 %881
    %v884 = vmul.f32 %v878, %v882
    %886 = vrot.lane.b32.xlu0 %v884, 64
    %v887 = vpop.permute.xlu0 %886
    %v889 = vadd.f32 %v152, %v887
    %v890 = vtanh.pop %v889
    %v891 = vsub.f32 1.0, %v878
    %893 = vrot.lane.b32.xlu0 %v890, 96
    %v894 = vpop.permute.xlu0 %893
    %v896 = vmul.f32 %v891, %v894
    %v897 = vrot.slane %v791, 6
    %v899 = vmul.f32 %v878, %v897
    %v900 = vadd.f32 %v896, %v899
    %v901 = vmul.f32 %v658, %v900
    %902 = vrot.lane.b32.xlu0 %v897, 96
    %v903 = vpop.permute.xlu0 %902
    %v905 = vmul.f32 %v665, %v903
    %907 = vrot.lane.b32.xlu0 %v905, 32
    %v908 = vpop.permute.xlu0 %907
    %v910 = vadd.f32 %v901, %v908
    %v912 = vrot.slane %v910, 4
    %913 = vrot.lane.b32.xlu0 %v912, 96
    %v914 = vpop.permute.xlu0 %913
    %v915 = vsel %vm188, %v914, 0
    %917 = vmatprep.subr.mxu0 0.0
    %918 = vmatpush1.msra.mxu0 %v37
    %919 = vmatprep.subr.mxu0 0.0
    %920 = vmatpush1.msra.mxu0 %v38
    %921 = vmatprep.subr.mxu0 0.0
    %922 = vmatpush1.msra.mxu0 %v39
    %923 = vmatprep.subr.mxu0 0.0
    %924 = vmatpush1.msra.mxu0 %v40
    %925 = vmatprep.subr.mxu0 0.0
    %926 = vmatpush1.msra.mxu0 0.0
    %927 = vmatprep.subr.mxu0 0.0
    %928 = vmatpush1.msra.mxu0 0.0
    %929 = vmatprep.subr.mxu0 0.0
    %930 = vmatpush1.msra.mxu0 0.0
    %931 = vmatprep.subr.mxu0 0.0
    %932 = vmatpush1.msra.mxu0 0.0
    %933 = vmatprep.subr.mxu0 0.0
    %934 = vmatpush1.msra.mxu0 0.0
    %935 = vmatprep.subr.mxu0 0.0
    %936 = vmatpush1.msra.mxu0 0.0
    %937 = vmatprep.subr.mxu0 0.0
    %938 = vmatpush1.msra.mxu0 0.0
    %939 = vmatprep.subr.mxu0 0.0
    %940 = vmatpush1.msra.mxu0 0.0
    %941 = vmatprep.subr.mxu0 0.0
    %942 = vmatpush1.msra.mxu0 0.0
    %943 = vmatprep.subr.mxu0 0.0
    %944 = vmatpush1.msra.mxu0 0.0
    %945 = vmatprep.subr.mxu0 0.0
    %946 = vmatpush1.msra.mxu0 0.0
    %947 = vmatprep.subr.mxu0 0.0
    %948 = vmatpush1.msra.mxu0 0.0
    %949 = vmatprep.subr.mxu0 0.0
    %950 = vmatpush1.msra.mxu0 0.0
    %951 = vmatprep.subr.mxu0 0.0
    %952 = vmatpush1.msra.mxu0 0.0
    %953 = vmatprep.subr.mxu0 0.0
    %954 = vmatpush1.msra.mxu0 0.0
    %955 = vmatprep.subr.mxu0 0.0
    %956 = vmatpush1.msra.mxu0 0.0
    %957 = vmatprep.subr.mxu0 0.0
    %958 = vmatpush1.msra.mxu0 0.0
    %959 = vmatprep.subr.mxu0 0.0
    %960 = vmatpush1.msra.mxu0 0.0
    %961 = vmatprep.subr.mxu0 0.0
    %962 = vmatpush1.msra.mxu0 0.0
    %963 = vmatprep.subr.mxu0 0.0
    %964 = vmatpush1.msra.mxu0 0.0
    %965 = vmatprep.subr.mxu0 0.0
    %966 = vmatpush1.msra.mxu0 0.0
    %967 = vmatprep.subr.mxu0 0.0
    %968 = vmatpush1.msra.mxu0 0.0
    %969 = vmatprep.subr.mxu0 0.0
    %970 = vmatpush1.msra.mxu0 0.0
    %971 = vmatprep.subr.mxu0 0.0
    %972 = vmatpush1.msra.mxu0 0.0
    %973 = vmatprep.subr.mxu0 0.0
    %974 = vmatpush1.msra.mxu0 0.0
    %975 = vmatprep.subr.mxu0 0.0
    %976 = vmatpush1.msra.mxu0 0.0
    %977 = vmatprep.subr.mxu0 0.0
    %978 = vmatpush1.msra.mxu0 0.0
    %979 = vmatprep.subr.mxu0 0.0
    %980 = vmatpush1.msra.mxu0 0.0
    %981 = vmatprep.mubr.f32.mxu0 0.0
    %982 = vmatmul.mubr.f32.gmra.mrb[0].mxu0 %v915
    %v983 = vpop.f32.mrb[0].mxu0
    %v984 = vadd.f32 0.0, %v983
    %v985 = vpop.f32.mrb[0].mxu0
    %986 = vdwg.mxu0
    %v988 = vrot.slane %v984, 2
    %v990 = vadd.f32 %v152, %v988
    %v991 = vadd.f32 %v984, %v267
    %v992 = vxor.u32 %v990, 2147483648
    %v993 = vmul.f32 %v992, 1.442695
    %v994 = vpow.pop %v993
    %v995 = vadd.f32 %v994, 1.0
    %v996 = vrcp.pop %v995
    %v997 = vmul.f32 1.0, %v996
    %v999 = vrot.slane %v991, 2
    %1000 = vrot.lane.b32.xlu0 %v999, 64
    %v1001 = vpop.permute.xlu0 %1000
    %v1003 = vmul.f32 %v997, %v1001
    %1005 = vrot.lane.b32.xlu0 %v1003, 64
    %v1006 = vpop.permute.xlu0 %1005
    %v1008 = vadd.f32 %v152, %v1006
    %v1009 = vtanh.pop %v1008
    %v1010 = vsub.f32 1.0, %v997
    %1012 = vrot.lane.b32.xlu0 %v1009, 96
    %v1013 = vpop.permute.xlu0 %1012
    %v1015 = vmul.f32 %v1010, %v1013
    %v1016 = vrot.slane %v910, 6
    %v1018 = vmul.f32 %v997, %v1016
    %v1019 = vadd.f32 %v1015, %v1018
    %v1020 = vmul.f32 %v658, %v1019
    %1021 = vrot.lane.b32.xlu0 %v1016, 96
    %v1022 = vpop.permute.xlu0 %1021
    %v1024 = vmul.f32 %v665, %v1022
    %1026 = vrot.lane.b32.xlu0 %v1024, 32
    %v1027 = vpop.permute.xlu0 %1026
    %v1029 = vadd.f32 %v1020, %v1027
    %v1031 = vrot.slane %v1029, 6
    %1032 = vrot.lane.b32.xlu0 %v1031, 96
    %v1033 = vpop.permute.xlu0 %1032
    %v1034 = vsel %vm188, %v1033, 0
    %1036 = vmatprep.subr.mxu0 0.0
    %1037 = vmatpush1.msra.mxu0 %v41
    %1038 = vmatprep.subr.mxu0 0.0
    %1039 = vmatpush1.msra.mxu0 %v42
    %1040 = vmatprep.subr.mxu0 0.0
    %1041 = vmatpush1.msra.mxu0 %v43
    %1042 = vmatprep.subr.mxu0 0.0
    %1043 = vmatpush1.msra.mxu0 %v44
    %1044 = vmatprep.subr.mxu0 0.0
    %1045 = vmatpush1.msra.mxu0 0.0
    %1046 = vmatprep.subr.mxu0 0.0
    %1047 = vmatpush1.msra.mxu0 0.0
    %1048 = vmatprep.subr.mxu0 0.0
    %1049 = vmatpush1.msra.mxu0 0.0
    %1050 = vmatprep.subr.mxu0 0.0
    %1051 = vmatpush1.msra.mxu0 0.0
    %1052 = vmatprep.subr.mxu0 0.0
    %1053 = vmatpush1.msra.mxu0 0.0
    %1054 = vmatprep.subr.mxu0 0.0
    %1055 = vmatpush1.msra.mxu0 0.0
    %1056 = vmatprep.subr.mxu0 0.0
    %1057 = vmatpush1.msra.mxu0 0.0
    %1058 = vmatprep.subr.mxu0 0.0
    %1059 = vmatpush1.msra.mxu0 0.0
    %1060 = vmatprep.subr.mxu0 0.0
    %1061 = vmatpush1.msra.mxu0 0.0
    %1062 = vmatprep.subr.mxu0 0.0
    %1063 = vmatpush1.msra.mxu0 0.0
    %1064 = vmatprep.subr.mxu0 0.0
    %1065 = vmatpush1.msra.mxu0 0.0
    %1066 = vmatprep.subr.mxu0 0.0
    %1067 = vmatpush1.msra.mxu0 0.0
    %1068 = vmatprep.subr.mxu0 0.0
    %1069 = vmatpush1.msra.mxu0 0.0
    %1070 = vmatprep.subr.mxu0 0.0
    %1071 = vmatpush1.msra.mxu0 0.0
    %1072 = vmatprep.subr.mxu0 0.0
    %1073 = vmatpush1.msra.mxu0 0.0
    %1074 = vmatprep.subr.mxu0 0.0
    %1075 = vmatpush1.msra.mxu0 0.0
    %1076 = vmatprep.subr.mxu0 0.0
    %1077 = vmatpush1.msra.mxu0 0.0
    %1078 = vmatprep.subr.mxu0 0.0
    %1079 = vmatpush1.msra.mxu0 0.0
    %1080 = vmatprep.subr.mxu0 0.0
    %1081 = vmatpush1.msra.mxu0 0.0
    %1082 = vmatprep.subr.mxu0 0.0
    %1083 = vmatpush1.msra.mxu0 0.0
    %1084 = vmatprep.subr.mxu0 0.0
    %1085 = vmatpush1.msra.mxu0 0.0
    %1086 = vmatprep.subr.mxu0 0.0
    %1087 = vmatpush1.msra.mxu0 0.0
    %1088 = vmatprep.subr.mxu0 0.0
    %1089 = vmatpush1.msra.mxu0 0.0
    %1090 = vmatprep.subr.mxu0 0.0
    %1091 = vmatpush1.msra.mxu0 0.0
    %1092 = vmatprep.subr.mxu0 0.0
    %1093 = vmatpush1.msra.mxu0 0.0
    %1094 = vmatprep.subr.mxu0 0.0
    %1095 = vmatpush1.msra.mxu0 0.0
    %1096 = vmatprep.subr.mxu0 0.0
    %1097 = vmatpush1.msra.mxu0 0.0
    %1098 = vmatprep.subr.mxu0 0.0
    %1099 = vmatpush1.msra.mxu0 0.0
    %1100 = vmatprep.mubr.f32.mxu0 0.0
    %1101 = vmatmul.mubr.f32.gmra.mrb[0].mxu0 %v1034
    %v1102 = vpop.f32.mrb[0].mxu0
    %v1103 = vadd.f32 0.0, %v1102
    %v1104 = vpop.f32.mrb[0].mxu0
    %1105 = vdwg.mxu0
    %1106 = vmatprep.subr.mxu0 0.0
    %1107 = vmatpush1.msra.mxu0 %v45
    %1108 = vmatprep.subr.mxu0 0.0
    %1109 = vmatpush1.msra.mxu0 %v46
    %1110 = vmatprep.subr.mxu0 0.0
    %1111 = vmatpush1.msra.mxu0 %v47
    %1112 = vmatprep.subr.mxu0 0.0
    %1113 = vmatpush1.msra.mxu0 %v48
    %1114 = vmatprep.subr.mxu0 0.0
    %1115 = vmatpush1.msra.mxu0 0.0
    %1116 = vmatprep.subr.mxu0 0.0
    %1117 = vmatpush1.msra.mxu0 0.0
    %1118 = vmatprep.subr.mxu0 0.0
    %1119 = vmatpush1.msra.mxu0 0.0
    %1120 = vmatprep.subr.mxu0 0.0
    %1121 = vmatpush1.msra.mxu0 0.0
    %1122 = vmatprep.subr.mxu0 0.0
    %1123 = vmatpush1.msra.mxu0 0.0
    %1124 = vmatprep.subr.mxu0 0.0
    %1125 = vmatpush1.msra.mxu0 0.0
    %1126 = vmatprep.subr.mxu0 0.0
    %1127 = vmatpush1.msra.mxu0 0.0
    %1128 = vmatprep.subr.mxu0 0.0
    %1129 = vmatpush1.msra.mxu0 0.0
    %1130 = vmatprep.subr.mxu0 0.0
    %1131 = vmatpush1.msra.mxu0 0.0
    %1132 = vmatprep.subr.mxu0 0.0
    %1133 = vmatpush1.msra.mxu0 0.0
    %1134 = vmatprep.subr.mxu0 0.0
    %1135 = vmatpush1.msra.mxu0 0.0
    %1136 = vmatprep.subr.mxu0 0.0
    %1137 = vmatpush1.msra.mxu0 0.0
    %1138 = vmatprep.subr.mxu0 0.0
    %1139 = vmatpush1.msra.mxu0 0.0
    %1140 = vmatprep.subr.mxu0 0.0
    %1141 = vmatpush1.msra.mxu0 0.0
    %1142 = vmatprep.subr.mxu0 0.0
    %1143 = vmatpush1.msra.mxu0 0.0
    %1144 = vmatprep.subr.mxu0 0.0
    %1145 = vmatpush1.msra.mxu0 0.0
    %1146 = vmatprep.subr.mxu0 0.0
    %1147 = vmatpush1.msra.mxu0 0.0
    %1148 = vmatprep.subr.mxu0 0.0
    %1149 = vmatpush1.msra.mxu0 0.0
    %1150 = vmatprep.subr.mxu0 0.0
    %1151 = vmatpush1.msra.mxu0 0.0
    %1152 = vmatprep.subr.mxu0 0.0
    %1153 = vmatpush1.msra.mxu0 0.0
    %1154 = vmatprep.subr.mxu0 0.0
    %1155 = vmatpush1.msra.mxu0 0.0
    %1156 = vmatprep.subr.mxu0 0.0
    %1157 = vmatpush1.msra.mxu0 0.0
    %1158 = vmatprep.subr.mxu0 0.0
    %1159 = vmatpush1.msra.mxu0 0.0
    %1160 = vmatprep.subr.mxu0 0.0
    %1161 = vmatpush1.msra.mxu0 0.0
    %1162 = vmatprep.subr.mxu0 0.0
    %1163 = vmatpush1.msra.mxu0 0.0
    %1164 = vmatprep.subr.mxu0 0.0
    %1165 = vmatpush1.msra.mxu0 0.0
    %1166 = vmatprep.subr.mxu0 0.0
    %1167 = vmatpush1.msra.mxu0 0.0
    %1168 = vmatprep.subr.mxu0 0.0
    %1169 = vmatpush1.msra.mxu0 0.0
    %1170 = vmatprep.mubr.f32.mxu0 0.0
    %1171 = vmatmul.mubr.f32.gmra.mrb[0].mxu0 %v1034
    %v1172 = vpop.f32.mrb[0].mxu0
    %v1173 = vadd.f32 0.0, %v1172
    %v1174 = vpop.f32.mrb[0].mxu0
    %1175 = vdwg.mxu0
    %v1176 = vlaneseq
    %v1177 = vshrl.u32 %v1176, 7
    %v1178 = vsub.s32 2, %v1177
    %v1179 = vrot.slane %v32, %v1178
    %v1180 = vadd.f32 %v1103, %v1179
    %1182 = vset.pattern.permute.xlu0 0
    %1183 = vperm.xlu0 %1182, %v35
    %v1184 = vpop.permute.xlu0 %1183
    %v1186 = vlaneseq
    %v1187 = vshrl.u32 %v1186, 7
    %v1188 = vsub.s32 5, %v1187
    %v1189 = vrot.slane %v32, %v1188
    %v1190 = vmul.f32 %v1184, %v1189
    %v1191 = vadd.f32 %v1180, %v1190
    %v1192 = vadd.f32 %v1191, %v1173
    %v1193 = vlaneseq
    %v1194 = vshrl.u32 %v1193, 7
    %v1195 = vsub.s32 4, %v1194
    %v1196 = vrot.slane %v32, %v1195
    %1198 = vrot.lane.b32.xlu0 %v1196, 64
    %v1199 = vpop.permute.xlu0 %1198
    %v1201 = vadd.f32 %v1173, %v1199
    %v1202 = vxor.u32 %v1192, 2147483648
    %v1203 = vmul.f32 %v1202, 1.442695
    %v1204 = vpow.pop %v1203
    %v1205 = vadd.f32 %v1204, 1.0
    %v1206 = vrcp.pop %v1205
    %v1207 = vmul.f32 1.0, %v1206
    %1209 = vrot.lane.b32.xlu0 %v1201, 64
    %v1210 = vpop.permute.xlu0 %1209
    %v1212 = vmul.f32 %v1207, %v1210
    %1214 = vrot.lane.b32.xlu0 %v1212, 64
    %v1215 = vpop.permute.xlu0 %1214
    %v1217 = vadd.f32 %v1191, %v1215
    %v1218 = vtanh.pop %v1217
    %v1219 = vsub.f32 1.0, %v1207
    %1221 = vrot.lane.b32.xlu0 %v1218, 96
    %v1222 = vpop.permute.xlu0 %1221
    %v1224 = vmul.f32 %v1219, %v1222
    %v1226 = vmul.f32 %v1207, %v1031
    %v1227 = vadd.f32 %v1224, %v1226
    %v1228 = vlaneseq
    %v1229 = vshrl.u32 %v1228, 7
    %v1230 = vsub.s32 3, %v1229
    %v1231 = vrot.slane %v32, %v1230
    %v1232 = vadd.f32 %v1103, %v1231
    %1234 = vrot.lane.b32.xlu0 %v1227, 96
    %v1235 = vpop.permute.xlu0 %1234
    %v1236 = vsel %vm188, %v1235, 0
    %1238 = vmatprep.subr.mxu0 0.0
    %1239 = vmatpush1.msra.mxu0 %v49
    %1240 = vmatprep.subr.mxu0 0.0
    %1241 = vmatpush1.msra.mxu0 %v50
    %1242 = vmatprep.subr.mxu0 0.0
    %1243 = vmatpush1.msra.mxu0 %v51
    %1244 = vmatprep.subr.mxu0 0.0
    %1245 = vmatpush1.msra.mxu0 %v52
    %1246 = vmatprep.subr.mxu0 0.0
    %1247 = vmatpush1.msra.mxu0 0.0
    %1248 = vmatprep.subr.mxu0 0.0
    %1249 = vmatpush1.msra.mxu0 0.0
    %1250 = vmatprep.subr.mxu0 0.0
    %1251 = vmatpush1.msra.mxu0 0.0
    %1252 = vmatprep.subr.mxu0 0.0
    %1253 = vmatpush1.msra.mxu0 0.0
    %1254 = vmatprep.subr.mxu0 0.0
    %1255 = vmatpush1.msra.mxu0 0.0
    %1256 = vmatprep.subr.mxu0 0.0
    %1257 = vmatpush1.msra.mxu0 0.0
    %1258 = vmatprep.subr.mxu0 0.0
    %1259 = vmatpush1.msra.mxu0 0.0
    %1260 = vmatprep.subr.mxu0 0.0
    %1261 = vmatpush1.msra.mxu0 0.0
    %1262 = vmatprep.subr.mxu0 0.0
    %1263 = vmatpush1.msra.mxu0 0.0
    %1264 = vmatprep.subr.mxu0 0.0
    %1265 = vmatpush1.msra.mxu0 0.0
    %1266 = vmatprep.subr.mxu0 0.0
    %1267 = vmatpush1.msra.mxu0 0.0
    %1268 = vmatprep.subr.mxu0 0.0
    %1269 = vmatpush1.msra.mxu0 0.0
    %1270 = vmatprep.subr.mxu0 0.0
    %1271 = vmatpush1.msra.mxu0 0.0
    %1272 = vmatprep.subr.mxu0 0.0
    %1273 = vmatpush1.msra.mxu0 0.0
    %1274 = vmatprep.subr.mxu0 0.0
    %1275 = vmatpush1.msra.mxu0 0.0
    %1276 = vmatprep.subr.mxu0 0.0
    %1277 = vmatpush1.msra.mxu0 0.0
    %1278 = vmatprep.subr.mxu0 0.0
    %1279 = vmatpush1.msra.mxu0 0.0
    %1280 = vmatprep.subr.mxu0 0.0
    %1281 = vmatpush1.msra.mxu0 0.0
    %1282 = vmatprep.subr.mxu0 0.0
    %1283 = vmatpush1.msra.mxu0 0.0
    %1284 = vmatprep.subr.mxu0 0.0
    %1285 = vmatpush1.msra.mxu0 0.0
    %1286 = vmatprep.subr.mxu0 0.0
    %1287 = vmatpush1.msra.mxu0 0.0
    %1288 = vmatprep.subr.mxu0 0.0
    %1289 = vmatpush1.msra.mxu0 0.0
    %1290 = vmatprep.subr.mxu0 0.0
    %1291 = vmatpush1.msra.mxu0 0.0
    %1292 = vmatprep.subr.mxu0 0.0
    %1293 = vmatpush1.msra.mxu0 0.0
    %1294 = vmatprep.subr.mxu0 0.0
    %1295 = vmatpush1.msra.mxu0 0.0
    %1296 = vmatprep.subr.mxu0 0.0
    %1297 = vmatpush1.msra.mxu0 0.0
    %1298 = vmatprep.subr.mxu0 0.0
    %1299 = vmatpush1.msra.mxu0 0.0
    %1300 = vmatprep.subr.mxu0 0.0
    %1301 = vmatpush1.msra.mxu0 0.0
    %1302 = vmatprep.mubr.f32.mxu0 0.0
    %1303 = vmatmul.mubr.f32.gmra.mrb[0].mxu0 %v1236
    %v1304 = vpop.f32.mrb[0].mxu0
    %v1305 = vadd.f32 0.0, %v1304
    %v1306 = vpop.f32.mrb[0].mxu0
    %1307 = vdwg.mxu0
    %v1308 = vadd.f32 %v1232, %v1305
    %1310 = vrot.lane.b32.xlu0 %v1305, 96
    %v1311 = vpop.permute.xlu0 %1310
    %v1313 = vadd.f32 %v1232, %v1311
    %v1314 = vadd.f32 %v1305, %v1199
    %v1315 = vxor.u32 %v1308, 2147483648
    %v1316 = vmul.f32 %v1315, 1.442695
    %v1317 = vpow.pop %v1316
    %v1318 = vadd.f32 %v1317, 1.0
    %v1319 = vrcp.pop %v1318
    %v1320 = vmul.f32 1.0, %v1319
    %1322 = vrot.lane.b32.xlu0 %v1314, 64
    %v1323 = vpop.permute.xlu0 %1322
    %v1325 = vmul.f32 %v1320, %v1323
    %1327 = vrot.lane.b32.xlu0 %v1325, 64
    %v1328 = vpop.permute.xlu0 %1327
    %v1330 = vadd.f32 %v1313, %v1328
    %v1331 = vtanh.pop %v1330
    %v1332 = vsub.f32 1.0, %v1320
    %1334 = vrot.lane.b32.xlu0 %v1331, 96
    %v1335 = vpop.permute.xlu0 %1334
    %v1337 = vmul.f32 %v1332, %v1335
    %v1338 = vmul.f32 %v1320, %v1227
    %v1339 = vadd.f32 %v1337, %v1338
    %1341 = vrot.lane.b32.xlu0 %v1339, 96
    %v1342 = vpop.permute.xlu0 %1341
    %v1343 = vsel %vm188, %v1342, 0
    %1345 = vmatprep.subr.mxu0 0.0
    %1346 = vmatpush1.msra.mxu0 %v49
    %1347 = vmatprep.subr.mxu0 0.0
    %1348 = vmatpush1.msra.mxu0 %v50
    %1349 = vmatprep.subr.mxu0 0.0
    %1350 = vmatpush1.msra.mxu0 %v51
    %1351 = vmatprep.subr.mxu0 0.0
    %1352 = vmatpush1.msra.mxu0 %v52
    %1353 = vmatprep.subr.mxu0 0.0
    %1354 = vmatpush1.msra.mxu0 0.0
    %1355 = vmatprep.subr.mxu0 0.0
    %1356 = vmatpush1.msra.mxu0 0.0
    %1357 = vmatprep.subr.mxu0 0.0
    %1358 = vmatpush1.msra.mxu0 0.0
    %1359 = vmatprep.subr.mxu0 0.0
    %1360 = vmatpush1.msra.mxu0 0.0
    %1361 = vmatprep.subr.mxu0 0.0
    %1362 = vmatpush1.msra.mxu0 0.0
    %1363 = vmatprep.subr.mxu0 0.0
    %1364 = vmatpush1.msra.mxu0 0.0
    %1365 = vmatprep.subr.mxu0 0.0
    %1366 = vmatpush1.msra.mxu0 0.0
    %1367 = vmatprep.subr.mxu0 0.0
    %1368 = vmatpush1.msra.mxu0 0.0
    %1369 = vmatprep.subr.mxu0 0.0
    %1370 = vmatpush1.msra.mxu0 0.0
    %1371 = vmatprep.subr.mxu0 0.0
    %1372 = vmatpush1.msra.mxu0 0.0
    %1373 = vmatprep.subr.mxu0 0.0
    %1374 = vmatpush1.msra.mxu0 0.0
    %1375 = vmatprep.subr.mxu0 0.0
    %1376 = vmatpush1.msra.mxu0 0.0
    %1377 = vmatprep.subr.mxu0 0.0
    %1378 = vmatpush1.msra.mxu0 0.0
    %1379 = vmatprep.subr.mxu0 0.0
    %1380 = vmatpush1.msra.mxu0 0.0
    %1381 = vmatprep.subr.mxu0 0.0
    %1382 = vmatpush1.msra.mxu0 0.0
    %1383 = vmatprep.subr.mxu0 0.0
    %1384 = vmatpush1.msra.mxu0 0.0
    %1385 = vmatprep.subr.mxu0 0.0
    %1386 = vmatpush1.msra.mxu0 0.0
    %1387 = vmatprep.subr.mxu0 0.0
    %1388 = vmatpush1.msra.mxu0 0.0
    %1389 = vmatprep.subr.mxu0 0.0
    %1390 = vmatpush1.msra.mxu0 0.0
    %1391 = vmatprep.subr.mxu0 0.0
    %1392 = vmatpush1.msra.mxu0 0.0
    %1393 = vmatprep.subr.mxu0 0.0
    %1394 = vmatpush1.msra.mxu0 0.0
    %1395 = vmatprep.subr.mxu0 0.0
    %1396 = vmatpush1.msra.mxu0 0.0
    %1397 = vmatprep.subr.mxu0 0.0
    %1398 = vmatpush1.msra.mxu0 0.0
    %1399 = vmatprep.subr.mxu0 0.0
    %1400 = vmatpush1.msra.mxu0 0.0
    %1401 = vmatprep.subr.mxu0 0.0
    %1402 = vmatpush1.msra.mxu0 0.0
    %1403 = vmatprep.subr.mxu0 0.0
    %1404 = vmatpush1.msra.mxu0 0.0
    %1405 = vmatprep.subr.mxu0 0.0
    %1406 = vmatpush1.msra.mxu0 0.0
    %1407 = vmatprep.subr.mxu0 0.0
    %1408 = vmatpush1.msra.mxu0 0.0
    %1409 = vmatprep.mubr.f32.mxu0 0.0
    %1410 = vmatmul.mubr.f32.gmra.mrb[0].mxu0 %v1343
    %v1411 = vpop.f32.mrb[0].mxu0
    %v1412 = vadd.f32 0.0, %v1411
    %v1413 = vpop.f32.mrb[0].mxu0
    %1414 = vdwg.mxu0
    %v1415 = vadd.f32 %v1232, %v1412
    %1417 = vrot.lane.b32.xlu0 %v1412, 96
    %v1418 = vpop.permute.xlu0 %1417
    %v1420 = vadd.f32 %v1232, %v1418
    %v1421 = vadd.f32 %v1412, %v1199
    %v1422 = vxor.u32 %v1415, 2147483648
    %v1423 = vmul.f32 %v1422, 1.442695
    %v1424 = vpow.pop %v1423
    %v1425 = vadd.f32 %v1424, 1.0
    %v1426 = vrcp.pop %v1425
    %v1427 = vmul.f32 1.0, %v1426
    %1429 = vrot.lane.b32.xlu0 %v1421, 64
    %v1430 = vpop.permute.xlu0 %1429
    %v1432 = vmul.f32 %v1427, %v1430
    %1434 = vrot.lane.b32.xlu0 %v1432, 64
    %v1435 = vpop.permute.xlu0 %1434
    %v1437 = vadd.f32 %v1420, %v1435
    %v1438 = vtanh.pop %v1437
    %v1439 = vsub.f32 1.0, %v1427
    %1441 = vrot.lane.b32.xlu0 %v1438, 96
    %v1442 = vpop.permute.xlu0 %1441
    %v1444 = vmul.f32 %v1439, %v1442
    %v1445 = vmul.f32 %v1427, %v1339
    %v1446 = vadd.f32 %v1444, %v1445
    %1448 = vrot.lane.b32.xlu0 %v1446, 96
    %v1449 = vpop.permute.xlu0 %1448
    %v1450 = vsel %vm188, %v1449, 0
    %1452 = vmatprep.subr.mxu0 0.0
    %1453 = vmatpush1.msra.mxu0 %v49
    %1454 = vmatprep.subr.mxu0 0.0
    %1455 = vmatpush1.msra.mxu0 %v50
    %1456 = vmatprep.subr.mxu0 0.0
    %1457 = vmatpush1.msra.mxu0 %v51
    %1458 = vmatprep.subr.mxu0 0.0
    %1459 = vmatpush1.msra.mxu0 %v52
    %1460 = vmatprep.subr.mxu0 0.0
    %1461 = vmatpush1.msra.mxu0 0.0
    %1462 = vmatprep.subr.mxu0 0.0
    %1463 = vmatpush1.msra.mxu0 0.0
    %1464 = vmatprep.subr.mxu0 0.0
    %1465 = vmatpush1.msra.mxu0 0.0
    %1466 = vmatprep.subr.mxu0 0.0
    %1467 = vmatpush1.msra.mxu0 0.0
    %1468 = vmatprep.subr.mxu0 0.0
    %1469 = vmatpush1.msra.mxu0 0.0
    %1470 = vmatprep.subr.mxu0 0.0
    %1471 = vmatpush1.msra.mxu0 0.0
    %1472 = vmatprep.subr.mxu0 0.0
    %1473 = vmatpush1.msra.mxu0 0.0
    %1474 = vmatprep.subr.mxu0 0.0
    %1475 = vmatpush1.msra.mxu0 0.0
    %1476 = vmatprep.subr.mxu0 0.0
    %1477 = vmatpush1.msra.mxu0 0.0
    %1478 = vmatprep.subr.mxu0 0.0
    %1479 = vmatpush1.msra.mxu0 0.0
    %1480 = vmatprep.subr.mxu0 0.0
    %1481 = vmatpush1.msra.mxu0 0.0
    %1482 = vmatprep.subr.mxu0 0.0
    %1483 = vmatpush1.msra.mxu0 0.0
    %1484 = vmatprep.subr.mxu0 0.0
    %1485 = vmatpush1.msra.mxu0 0.0
    %1486 = vmatprep.subr.mxu0 0.0
    %1487 = vmatpush1.msra.mxu0 0.0
    %1488 = vmatprep.subr.mxu0 0.0
    %1489 = vmatpush1.msra.mxu0 0.0
    %1490 = vmatprep.subr.mxu0 0.0
    %1491 = vmatpush1.msra.mxu0 0.0
    %1492 = vmatprep.subr.mxu0 0.0
    %1493 = vmatpush1.msra.mxu0 0.0
    %1494 = vmatprep.subr.mxu0 0.0
    %1495 = vmatpush1.msra.mxu0 0.0
    %1496 = vmatprep.subr.mxu0 0.0
    %1497 = vmatpush1.msra.mxu0 0.0
    %1498 = vmatprep.subr.mxu0 0.0
    %1499 = vmatpush1.msra.mxu0 0.0
    %1500 = vmatprep.subr.mxu0 0.0
    %1501 = vmatpush1.msra.mxu0 0.0
    %1502 = vmatprep.subr.mxu0 0.0
    %1503 = vmatpush1.msra.mxu0 0.0
    %1504 = vmatprep.subr.mxu0 0.0
    %1505 = vmatpush1.msra.mxu0 0.0
    %1506 = vmatprep.subr.mxu0 0.0
    %1507 = vmatpush1.msra.mxu0 0.0
    %1508 = vmatprep.subr.mxu0 0.0
    %1509 = vmatpush1.msra.mxu0 0.0
    %1510 = vmatprep.subr.mxu0 0.0
    %1511 = vmatpush1.msra.mxu0 0.0
    %1512 = vmatprep.subr.mxu0 0.0
    %1513 = vmatpush1.msra.mxu0 0.0
    %1514 = vmatprep.subr.mxu0 0.0
    %1515 = vmatpush1.msra.mxu0 0.0
    %1516 = vmatprep.mubr.f32.mxu0 0.0
    %1517 = vmatmul.mubr.f32.gmra.mrb[0].mxu0 %v1450
    %v1518 = vpop.f32.mrb[0].mxu0
    %v1519 = vadd.f32 0.0, %v1518
    %v1520 = vpop.f32.mrb[0].mxu0
    %1521 = vdwg.mxu0
    %v1522 = vadd.f32 %v1232, %v1519
    %1524 = vrot.lane.b32.xlu0 %v1519, 96
    %v1525 = vpop.permute.xlu0 %1524
    %v1527 = vadd.f32 %v1232, %v1525
    %v1528 = vadd.f32 %v1519, %v1199
    %v1529 = vxor.u32 %v1522, 2147483648
    %v1530 = vmul.f32 %v1529, 1.442695
    %v1531 = vpow.pop %v1530
    %v1532 = vadd.f32 %v1531, 1.0
    %v1533 = vrcp.pop %v1532
    %v1534 = vmul.f32 1.0, %v1533
    %1536 = vrot.lane.b32.xlu0 %v1528, 64
    %v1537 = vpop.permute.xlu0 %1536
    %v1539 = vmul.f32 %v1534, %v1537
    %1541 = vrot.lane.b32.xlu0 %v1539, 64
    %v1542 = vpop.permute.xlu0 %1541
    %v1544 = vadd.f32 %v1527, %v1542
    %v1545 = vtanh.pop %v1544
    %v1546 = vsub.f32 1.0, %v1534
    %1548 = vrot.lane.b32.xlu0 %v1545, 96
    %v1549 = vpop.permute.xlu0 %1548
    %v1551 = vmul.f32 %v1546, %v1549
    %v1552 = vmul.f32 %v1534, %v1446
    %v1553 = vadd.f32 %v1551, %v1552
    %1555 = vrot.lane.b32.xlu0 %v1446, 32
    %v1556 = vpop.permute.xlu0 %1555
    %1559 = vrot.lane.b32.xlu0 %v1553, 64
    %v1560 = vpop.permute.xlu0 %1559
    %v1562 = vsel %vm188, %v1235, %v1339
    %vm1563 = vcmask 523264
    %v1564 = vsel %vm1563, %v1562, %v1556
    %vm1565 = vcmask 785408
    %v1566 = vsel %vm1565, %v1564, %v1560
    %1567 = vmatprep.subr.mxu0 0.0
    %1568 = vmatpush1.msra.mxu0 %v53
    %1569 = vmatprep.subr.mxu0 0.0
    %1570 = vmatpush1.msra.mxu0 %v54
    %1571 = vmatprep.subr.mxu0 0.0
    %1572 = vmatpush1.msra.mxu0 %v55
    %1573 = vmatprep.subr.mxu0 0.0
    %1574 = vmatpush1.msra.mxu0 %v56
    %1575 = vmatprep.subr.mxu0 0.0
    %1576 = vmatpush1.msra.mxu0 %v57
    %1577 = vmatprep.subr.mxu0 0.0
    %1578 = vmatpush1.msra.mxu0 %v58
    %1579 = vmatprep.subr.mxu0 0.0
    %1580 = vmatpush1.msra.mxu0 %v59
    %1581 = vmatprep.subr.mxu0 0.0
    %1582 = vmatpush1.msra.mxu0 %v60
    %1583 = vmatprep.subr.mxu0 0.0
    %1584 = vmatpush1.msra.mxu0 %v61
    %1585 = vmatprep.subr.mxu0 0.0
    %1586 = vmatpush1.msra.mxu0 %v62
    %1587 = vmatprep.subr.mxu0 0.0
    %1588 = vmatpush1.msra.mxu0 %v63
    %1589 = vmatprep.subr.mxu0 0.0
    %1590 = vmatpush1.msra.mxu0 %v64
    %1591 = vmatprep.subr.mxu0 0.0
    %1592 = vmatpush1.msra.mxu0 %v65
    %1593 = vmatprep.subr.mxu0 0.0
    %1594 = vmatpush1.msra.mxu0 %v66
    %1595 = vmatprep.subr.mxu0 0.0
    %1596 = vmatpush1.msra.mxu0 %v67
    %1597 = vmatprep.subr.mxu0 0.0
    %1598 = vmatpush1.msra.mxu0 %v68
    %1599 = vmatprep.subr.mxu0 0.0
    %1600 = vmatpush1.msra.mxu0 0.0
    %1601 = vmatprep.subr.mxu0 0.0
    %1602 = vmatpush1.msra.mxu0 0.0
    %1603 = vmatprep.subr.mxu0 0.0
    %1604 = vmatpush1.msra.mxu0 0.0
    %1605 = vmatprep.subr.mxu0 0.0
    %1606 = vmatpush1.msra.mxu0 0.0
    %1607 = vmatprep.subr.mxu0 0.0
    %1608 = vmatpush1.msra.mxu0 0.0
    %1609 = vmatprep.subr.mxu0 0.0
    %1610 = vmatpush1.msra.mxu0 0.0
    %1611 = vmatprep.subr.mxu0 0.0
    %1612 = vmatpush1.msra.mxu0 0.0
    %1613 = vmatprep.subr.mxu0 0.0
    %1614 = vmatpush1.msra.mxu0 0.0
    %1615 = vmatprep.subr.mxu0 0.0
    %1616 = vmatpush1.msra.mxu0 0.0
    %1617 = vmatprep.subr.mxu0 0.0
    %1618 = vmatpush1.msra.mxu0 0.0
    %1619 = vmatprep.subr.mxu0 0.0
    %1620 = vmatpush1.msra.mxu0 0.0
    %1621 = vmatprep.subr.mxu0 0.0
    %1622 = vmatpush1.msra.mxu0 0.0
    %1623 = vmatprep.subr.mxu0 0.0
    %1624 = vmatpush1.msra.mxu0 0.0
    %1625 = vmatprep.subr.mxu0 0.0
    %1626 = vmatpush1.msra.mxu0 0.0
    %1627 = vmatprep.subr.mxu0 0.0
    %1628 = vmatpush1.msra.mxu0 0.0
    %1629 = vmatprep.subr.mxu0 0.0
    %1630 = vmatpush1.msra.mxu0 0.0
    %1631 = vmatprep.mubr.f32.mxu0 0.0
    %1632 = vmatmul.mubr.f32.gmra.mrb[0].mxu0 %v1566
    %v1633 = vpop.f32.mrb[0].mxu0
    %v1634 = vadd.f32 0.0, %v1633
    %v1635 = vpop.f32.mrb[0].mxu0
    %1636 = vdwg.mxu0
    %v1638 = vrot.slane %v32, 6
    %s1639 = vtos %v1638
    %v1640 = vstv %s1639
    %v1642 = vadd.f32 %v1634, %v1640
    %vm1643 = vcmask 25600
    %1644 = vst.msk [vmem:[#allocation5] sm:$0x3] %vm1643, %v1642
    // Predicated region
    $region22: #{encoder_decoder_hidden_forward.1} parent=1 // pred_check
      _
    $region23: #{encoder_decoder_hidden_forward.1} parent=1 // pred_check_branch
      %1646 = sbr.rel (0) target = $region25
    $region24: #{encoder_decoder_hidden_forward.1} parent=1 // pred_region
      %s1648 = ssub.s32 32, 32
      %1649 = vsyncadd [#allocation4], %s1648
      %s1651 = sshll.u32 [#allocation5], 4
      %s1652 = int_to_ptr.vmem [resolvable:$true] %s1651
      %1654 = dma.vmem_to_hbm [thread:$0]  %s1652, 32, %s4, [#allocation4]
    $region25: #{encoder_decoder_hidden_forward.1} parent=1 // pred_fallthru
      _
    // Predicated region
    $region26: #{encoder_decoder_hidden_forward.1} parent=1 // pred_check
      _
    $region27: #{encoder_decoder_hidden_forward.1} parent=1 // pred_check_branch
      %1656 = sbr.rel (0) target = $region29
    $region28: #{encoder_decoder_hidden_forward.1} parent=1 // pred_region
      %1657 = dma.done [#allocation4], 32
    $region29: #{encoder_decoder_hidden_forward.1} parent=1 // pred_fallthru
      _
    %1658 = vsyncpa [#allocation3], 1
    %1659 = vsyncpa [#allocation4], 1

</llo_original>
